<compile_context>
chip_gen: v6e
topology: v6e:2x2x1
jax: 0.10.0
libtpu: 0.0.40
codegen_flags: <defaults>
</compile_context>

<pallas_src>
import functools

import jax
import jax.numpy as jnp
from jax.experimental import pallas as pl
from jax.experimental.pallas import tpu as pltpu


# ---------------------------------------------------------------------------
# Fused forward kernel: one grid step == TB samples.
# ---------------------------------------------------------------------------

def _fused_forward_kernel(
    x_ref,                       # (TB, Cin, S)  native layout: channels x spatial
    w1t_ref, b1_ref,             # (C1, Cin), (C1, 1)   hooked 'layer1' (1x1 conv + ReLU)
    w2t_ref, b2_ref,             # (C2, C1),  (C2, 1)   hooked 'layer2' (1x1 conv + ReLU)
    wh_ref, bh_ref,              # (C2, K),   (1, K)    backbone GAP + fc head
    wb1_ref, bb1_ref,            # (C1, F),   (1, F)    LPM branch for layer1
    wb2_ref, bb2_ref,            # (C2, F),   (1, F)    LPM branch for layer2
    wfa_ref, wfb_ref, bfc_ref,   # (F, 1), (F, 1), (1, 1)  split final LPM fc
    logits_ref,                  # (1, TB, K)
    loss_ref,                    # (1, TB, 1)
    *, inv_s,
):
    x = x_ref[...]                                        # (TB, Cin, S)
    tb = x.shape[0]

    # Backbone hooked layers: 1x1 conv + ReLU in (channels, spatial) layout.
    # Weight is broadcast once over the batch tile; f1/f2 stay in VMEM/vregs.
    w1t = jnp.broadcast_to(w1t_ref[...], (tb,) + w1t_ref.shape)
    f1 = jnp.maximum(
        jnp.einsum('bdc,bcs->bds', w1t, x,
                   preferred_element_type=jnp.float32) + b1_ref[...][None],
        0.0)                                              # (TB, C1, S)

    w2t = jnp.broadcast_to(w2t_ref[...], (tb,) + w2t_ref.shape)
    f2 = jnp.maximum(
        jnp.einsum('bdc,bcs->bds', w2t, f1,
                   preferred_element_type=jnp.float32) + b2_ref[...][None],
        0.0)                                              # (TB, C2, S)

    # AdaptiveAvgPool2d((1,1)) + Flatten == lane-axis sum * (1/S) (S is static).
    gap1 = jnp.sum(f1, axis=-1) * inv_s                   # (TB, C1)
    gap2 = jnp.sum(f2, axis=-1) * inv_s                   # (TB, C2)

    # Backbone classification head, batched across the tile's samples.
    logits_ref[0] = (
        jnp.dot(gap2, wh_ref[...], preferred_element_type=jnp.float32)
        + bh_ref[...]
    )                                                     # (TB, K)

    # LossPredictionModule branches (Linear + ReLU); the final fc over the
    # concat([br1, br2]) is expressed as two partial dots (no concat).
    br1 = jnp.maximum(
        jnp.dot(gap1, wb1_ref[...], preferred_element_type=jnp.float32)
        + bb1_ref[...], 0.0)                              # (TB, F)
    br2 = jnp.maximum(
        jnp.dot(gap2, wb2_ref[...], preferred_element_type=jnp.float32)
        + bb2_ref[...], 0.0)                              # (TB, F)
    loss_ref[0] = (
        jnp.dot(br1, wfa_ref[...], preferred_element_type=jnp.float32)
        + jnp.dot(br2, wfb_ref[...], preferred_element_type=jnp.float32)
        + bfc_ref[...]
    )                                                     # (TB, 1)


# ---------------------------------------------------------------------------
# Wrapper
# ---------------------------------------------------------------------------

def _pick_tb(n, c, s, itemsize=4, vmem_budget_bytes=8 << 20):
    """Largest batch-tile TB that (a) divides N, (b) keeps >= 2 grid steps when
    N >= 2 (v7x megacore), and (c) keeps the double-buffered input block under
    a conservative VMEM budget."""
    per_sample = c * s * itemsize
    cap = max(1, vmem_budget_bytes // (2 * per_sample))
    max_tb = max(1, n // 2) if n >= 2 else 1
    best = 1
    for tb in range(1, min(cap, max_tb) + 1):
        if n % tb == 0:
            best = tb
    return best


def learning_loss_forward(x_nchw, params, *, tb=None):
    """Fused forward. x: (N, C, H, W) NCHW. Returns (logits (N, K), loss_pred (N,))."""
    (w1, b1, w2, b2, wh, bh, wb1, bb1, wb2, bb2, wfc, bfc) = params
    N, C, H, W = x_nchw.shape
    S = H * W
    K = wh.shape[1]
    F = wb1.shape[1]

    if tb is None:
        tb = _pick_tb(N, C, S)
    assert N % tb == 0
    G = N // tb

    # Free reshape only (no HBM transpose): NCHW -> (N, C, S).  Channels land
    # on sublanes, spatial S on lanes (lane-dense since S is a multiple of 128
    # at these shapes; otherwise it is simply the full-dim block).
    x_ncs = x_nchw.reshape(N, C, S)

    # Tiny trace-time weight relayouts (constant folded by XLA):
    w1t = w1.T                      # (C1, Cin)
    w2t = w2.T                      # (C2, C1)
    b1c = b1.reshape(-1, 1)         # (C1, 1)  per-channel bias, broadcast over lanes
    b2c = b2.reshape(-1, 1)         # (C2, 1)
    wfa, wfb = wfc[:F], wfc[F:]     # split so the (N, 2F) concat never exists

    def _full(a):  # replicated full-array block for a (resident) parameter
        return pl.BlockSpec(a.shape, lambda n: (0, 0))

    logits3, loss3 = pl.pallas_call(
        functools.partial(_fused_forward_kernel, inv_s=1.0 / S),
        out_shape=(
            jax.ShapeDtypeStruct((G, tb, K), jnp.float32),
            jax.ShapeDtypeStruct((G, tb, 1), jnp.float32),
        ),
        grid=(G,),
        in_specs=[
            pl.BlockSpec((tb, C, S), lambda n: (n, 0, 0)),
            _full(w1t), _full(b1c),
            _full(w2t), _full(b2c),
            _full(wh), _full(bh),
            _full(wb1), _full(bb1),
            _full(wb2), _full(bb2),
            _full(wfa), _full(wfb), _full(bfc),
        ],
        out_specs=(
            pl.BlockSpec((1, tb, K), lambda n: (n, 0, 0)),
            pl.BlockSpec((1, tb, 1), lambda n: (n, 0, 0)),
        ),
        compiler_params=pltpu.CompilerParams(
            dimension_semantics=("parallel",)),  # batch tiles -> megacore on v7x
    )(x_ncs, w1t, b1c, w2t, b2c, wh, bh, wb1, bb1, wb2, bb2, wfa, wfb, bfc)

    return logits3.reshape(N, K), loss3.reshape(N)


# ---------------------------------------------------------------------------
# LearningLossModel: synthetic backbone (2 hooked layers) + LPM
# ---------------------------------------------------------------------------

class LearningLossModelPallas:
    """layer_ids = ['layer1', 'layer2'], in_features_list = [C1, C2],
    out_features = 128, channel_last = False (NCHW).
    # TODO(synk): PyTorch's forward-hook registration on an *arbitrary* backbone
    # has no Pallas equivalent; the hooked layers of a fixed small backbone are
    # computed directly inside the fused kernel instead."""

    def __init__(self, key, in_ch=4, c1=8, c2=16, num_classes=10,
                 out_features=128):
        ks = jax.random.split(key, 10)
        scale = 0.1
        f32 = jnp.float32
        # backbone: two 1x1-conv+ReLU "layers" (the hooked layers) + GAP+fc head
        self.w1 = (scale * jax.random.normal(ks[0], (in_ch, c1))).astype(f32)
        self.b1 = jnp.zeros((1, c1), f32)
        self.w2 = (scale * jax.random.normal(ks[1], (c1, c2))).astype(f32)
        self.b2 = jnp.zeros((1, c2), f32)
        self.w_head = (scale * jax.random.normal(ks[2], (c2, num_classes))).astype(f32)
        self.b_head = (scale * jax.random.normal(ks[3], (1, num_classes))).astype(f32)
        # LPM branches (one per hooked layer): GAP + Linear(C_i, out_features) + ReLU
        self.wb1 = (scale * jax.random.normal(ks[4], (c1, out_features))).astype(f32)
        self.bb1 = (scale * jax.random.normal(ks[5], (1, out_features))).astype(f32)
        self.wb2 = (scale * jax.random.normal(ks[6], (c2, out_features))).astype(f32)
        self.bb2 = (scale * jax.random.normal(ks[7], (1, out_features))).astype(f32)
        # LPM final fc: Linear(out_features * num_layers, 1)
        self.wfc = (scale * jax.random.normal(ks[8], (out_features * 2, 1))).astype(f32)
        self.bfc = (scale * jax.random.normal(ks[9], (1, 1))).astype(f32)

    def __call__(self, x_nchw):
        logits, loss_pred = learning_loss_forward(
            x_nchw,
            (self.w1, self.b1, self.w2, self.b2, self.w_head, self.b_head,
             self.wb1, self.bb1, self.wb2, self.bb2, self.wfc, self.bfc))
        return {"logits": logits, "loss_pred": loss_pred}

    # pure-JAX reference for verification
    def reference(self, x_nchw):
        N, C, H, W = x_nchw.shape
        x = x_nchw.reshape(N, C, H * W)

        def c1x1(xin, w, b):
            y = jnp.einsum("ncs,cd->nds", xin, w) + b.T[None, :, :]
            return jnp.maximum(y, 0.0)

        f1 = c1x1(x, self.w1, self.b1)
        f2 = c1x1(f1, self.w2, self.b2)
        logits = jnp.mean(f2, axis=-1) @ self.w_head + self.b_head
        br1 = jnp.maximum(jnp.mean(f1, axis=-1) @ self.wb1 + self.bb1, 0.0)
        br2 = jnp.maximum(jnp.mean(f2, axis=-1) @ self.wb2 + self.bb2, 0.0)
        feats = jnp.concatenate([br1, br2], axis=1)
        loss_pred = (feats @ self.wfc + self.bfc).reshape(-1)
        return {"logits": logits, "loss_pred": loss_pred}


if __name__ == "__main__":
    key = jax.random.PRNGKey(0)
    k_param, k_x = jax.random.split(key)

    model = LearningLossModelPallas(k_param, in_ch=4, c1=8, c2=16,
                                    num_classes=10, out_features=128)
    x = jax.random.normal(k_x, (2, 4, 16, 16), dtype=jnp.float32)  # NCHW

    out = model(x)
    jax.block_until_ready(out)

    ref = model.reference(x)
    assert out["logits"].shape == (2, 10)
    assert out["loss_pred"].shape == (2,)
    assert jnp.allclose(out["logits"], ref["logits"], atol=1e-4, rtol=1e-4)
    assert jnp.allclose(out["loss_pred"], ref["loss_pred"], atol=1e-4, rtol=1e-4)

    print("KERNEL_OK")
</pallas_src>

<mosaic_0001>
module attributes {stable_mosaic.version = 11 : i64} {
  func.func @_fused_forward_kernel(%arg0: i32, %arg1: memref<1x4x256xf32, #tpu.memory_space<vmem>>, %arg2: memref<8x4xf32, #tpu.memory_space<vmem>>, %arg3: memref<8x1xf32, #tpu.memory_space<vmem>>, %arg4: memref<16x8xf32, #tpu.memory_space<vmem>>, %arg5: memref<16x1xf32, #tpu.memory_space<vmem>>, %arg6: memref<16x10xf32, #tpu.memory_space<vmem>>, %arg7: memref<1x10xf32, #tpu.memory_space<vmem>>, %arg8: memref<8x128xf32, #tpu.memory_space<vmem>>, %arg9: memref<1x128xf32, #tpu.memory_space<vmem>>, %arg10: memref<16x128xf32, #tpu.memory_space<vmem>>, %arg11: memref<1x128xf32, #tpu.memory_space<vmem>>, %arg12: memref<128x1xf32, #tpu.memory_space<vmem>>, %arg13: memref<128x1xf32, #tpu.memory_space<vmem>>, %arg14: memref<1x1xf32, #tpu.memory_space<vmem>>, %arg15: memref<1x1x10xf32, #tpu.memory_space<vmem>>, %arg16: memref<1x1x1xf32, #tpu.memory_space<vmem>>) attributes {dimension_semantics = [#tpu.dimension_semantics<parallel>], iteration_bounds = array<i64: 2>, scalar_prefetch = 0 : i64, scratch_operands = 0 : i64, tpu.core_type = #tpu.core_type<tc>, window_params = [{transform_indices = @transform_0, window_bounds = array<i64: 1, 4, 256>}, {pipeline_mode = #tpu.pipeline_mode<synchronous>, transform_indices = @transform_1, window_bounds = array<i64: 8, 4>}, {pipeline_mode = #tpu.pipeline_mode<synchronous>, transform_indices = @transform_2, window_bounds = array<i64: 8, 1>}, {pipeline_mode = #tpu.pipeline_mode<synchronous>, transform_indices = @transform_3, window_bounds = array<i64: 16, 8>}, {pipeline_mode = #tpu.pipeline_mode<synchronous>, transform_indices = @transform_4, window_bounds = array<i64: 16, 1>}, {pipeline_mode = #tpu.pipeline_mode<synchronous>, transform_indices = @transform_5, window_bounds = array<i64: 16, 10>}, {pipeline_mode = #tpu.pipeline_mode<synchronous>, transform_indices = @transform_6, window_bounds = array<i64: 1, 10>}, {pipeline_mode = #tpu.pipeline_mode<synchronous>, transform_indices = @transform_7, window_bounds = array<i64: 8, 128>}, {pipeline_mode = #tpu.pipeline_mode<synchronous>, transform_indices = @transform_8, window_bounds = array<i64: 1, 128>}, {pipeline_mode = #tpu.pipeline_mode<synchronous>, transform_indices = @transform_9, window_bounds = array<i64: 16, 128>}, {pipeline_mode = #tpu.pipeline_mode<synchronous>, transform_indices = @transform_10, window_bounds = array<i64: 1, 128>}, {pipeline_mode = #tpu.pipeline_mode<synchronous>, transform_indices = @transform_11, window_bounds = array<i64: 128, 1>}, {pipeline_mode = #tpu.pipeline_mode<synchronous>, transform_indices = @transform_12, window_bounds = array<i64: 128, 1>}, {pipeline_mode = #tpu.pipeline_mode<synchronous>, transform_indices = @transform_13, window_bounds = array<i64: 1, 1>}, {transform_indices = @transform_14, window_bounds = array<i64: 1, 1, 10>}, {transform_indices = @transform_15, window_bounds = array<i64: 1, 1, 1>}]} {
    %c0 = arith.constant 0 : index
    %c0_0 = arith.constant 0 : index
    %c0_1 = arith.constant 0 : index
    %0 = vector.load %arg1[%c0, %c0_0, %c0_1] : memref<1x4x256xf32, #tpu.memory_space<vmem>>, vector<1x4x256xf32>
    %c0_2 = arith.constant 0 : index
    %c0_3 = arith.constant 0 : index
    %1 = vector.load %arg2[%c0_2, %c0_3] : memref<8x4xf32, #tpu.memory_space<vmem>>, vector<8x4xf32>
    %2 = vector.shape_cast %1 : vector<8x4xf32> to vector<1x8x4xf32>
    "tpu.trace_start"() <{level = 10 : i32, message = "bdc,bcs->bds"}> : () -> ()
    %cst = arith.constant dense<0.000000e+00> : vector<1x8x256xf32>
    %3 = tpu.matmul %2, %0, %cst {dimension_numbers = #tpu.dot_dimension_numbers<[2], [1], [1], [2], [0, 0, 0, 1, 1, 2], [0], [0]>} : vector<1x8x4xf32>, vector<1x4x256xf32>, vector<1x8x256xf32> -> vector<1x8x256xf32>
    "tpu.trace_stop"() : () -> ()
    %c0_4 = arith.constant 0 : index
    %c0_5 = arith.constant 0 : index
    %4 = vector.load %arg3[%c0_4, %c0_5] : memref<8x1xf32, #tpu.memory_space<vmem>>, vector<8x1xf32>
    %5 = vector.shape_cast %4 : vector<8x1xf32> to vector<1x8x1xf32>
    %6 = vector.broadcast %5 : vector<1x8x1xf32> to vector<1x8x256xf32>
    %7 = arith.addf %3, %6 : vector<1x8x256xf32>
    %cst_6 = arith.constant 0.000000e+00 : f32
    %8 = vector.broadcast %cst_6 : f32 to vector<1x8x256xf32>
    %9 = arith.maximumf %7, %8 : vector<1x8x256xf32>
    %c0_7 = arith.constant 0 : index
    %c0_8 = arith.constant 0 : index
    %10 = vector.load %arg4[%c0_7, %c0_8] : memref<16x8xf32, #tpu.memory_space<vmem>>, vector<16x8xf32>
    %11 = vector.shape_cast %10 : vector<16x8xf32> to vector<1x16x8xf32>
    "tpu.trace_start"() <{level = 10 : i32, message = "bdc,bcs->bds"}> : () -> ()
    %cst_9 = arith.constant dense<0.000000e+00> : vector<1x16x256xf32>
    %12 = tpu.matmul %11, %9, %cst_9 {dimension_numbers = #tpu.dot_dimension_numbers<[2], [1], [1], [2], [0, 0, 0, 1, 1, 2], [0], [0]>} : vector<1x16x8xf32>, vector<1x8x256xf32>, vector<1x16x256xf32> -> vector<1x16x256xf32>
    "tpu.trace_stop"() : () -> ()
    %c0_10 = arith.constant 0 : index
    %c0_11 = arith.constant 0 : index
    %13 = vector.load %arg5[%c0_10, %c0_11] : memref<16x1xf32, #tpu.memory_space<vmem>>, vector<16x1xf32>
    %14 = vector.shape_cast %13 : vector<16x1xf32> to vector<1x16x1xf32>
    %15 = vector.broadcast %14 : vector<1x16x1xf32> to vector<1x16x256xf32>
    %16 = arith.addf %12, %15 : vector<1x16x256xf32>
    %cst_12 = arith.constant 0.000000e+00 : f32
    %17 = vector.broadcast %cst_12 : f32 to vector<1x16x256xf32>
    %18 = arith.maximumf %16, %17 : vector<1x16x256xf32>
    %cst_13 = arith.constant dense<0.000000e+00> : vector<1x8xf32>
    %19 = vector.multi_reduction <add>, %9, %cst_13 [2] : vector<1x8x256xf32> to vector<1x8xf32>
    %cst_14 = arith.constant 3.906250e-03 : f32
    %20 = vector.broadcast %cst_14 : f32 to vector<1x8xf32>
    %21 = arith.mulf %19, %20 : vector<1x8xf32>
    %cst_15 = arith.constant dense<0.000000e+00> : vector<1x16xf32>
    %22 = vector.multi_reduction <add>, %18, %cst_15 [2] : vector<1x16x256xf32> to vector<1x16xf32>
    %cst_16 = arith.constant 3.906250e-03 : f32
    %23 = vector.broadcast %cst_16 : f32 to vector<1x16xf32>
    %24 = arith.mulf %22, %23 : vector<1x16xf32>
    %c0_17 = arith.constant 0 : index
    %c0_18 = arith.constant 0 : index
    %25 = vector.load %arg6[%c0_17, %c0_18] : memref<16x10xf32, #tpu.memory_space<vmem>>, vector<16x10xf32>
    %cst_19 = arith.constant dense<0.000000e+00> : vector<1x10xf32>
    %26 = tpu.matmul %24, %25, %cst_19 {dimension_numbers = #tpu.dot_dimension_numbers<[1], [0], [0], [1], [0, 0, 1, 1], [], []>} : vector<1x16xf32>, vector<16x10xf32>, vector<1x10xf32> -> vector<1x10xf32>
    %c0_20 = arith.constant 0 : index
    %c0_21 = arith.constant 0 : index
    %27 = vector.load %arg7[%c0_20, %c0_21] : memref<1x10xf32, #tpu.memory_space<vmem>>, vector<1x10xf32>
    %28 = arith.addf %26, %27 : vector<1x10xf32>
    %c0_22 = arith.constant 0 : index
    %c0_23 = arith.constant 0 : index
    %c0_24 = arith.constant 0 : index
    %29 = vector.load %arg15[%c0_22, %c0_23, %c0_24] : memref<1x1x10xf32, #tpu.memory_space<vmem>>, vector<1x1x10xf32>
    %30 = vector.shape_cast %29 : vector<1x1x10xf32> to vector<1x10xf32>
    %31 = vector.shape_cast %28 : vector<1x10xf32> to vector<1x1x10xf32>
    tpu.vector_store %arg15[%c0_22, %c0_23, %c0_24], %31 {strides = array<i32>} : memref<1x1x10xf32, #tpu.memory_space<vmem>>, vector<1x1x10xf32>,
    %c0_25 = arith.constant 0 : index
    %c0_26 = arith.constant 0 : index
    %32 = vector.load %arg8[%c0_25, %c0_26] : memref<8x128xf32, #tpu.memory_space<vmem>>, vector<8x128xf32>
    %cst_27 = arith.constant dense<0.000000e+00> : vector<1x128xf32>
    %33 = tpu.matmul %21, %32, %cst_27 {dimension_numbers = #tpu.dot_dimension_numbers<[1], [0], [0], [1], [0, 0, 1, 1], [], []>} : vector<1x8xf32>, vector<8x128xf32>, vector<1x128xf32> -> vector<1x128xf32>
    %c0_28 = arith.constant 0 : index
    %c0_29 = arith.constant 0 : index
    %34 = vector.load %arg9[%c0_28, %c0_29] : memref<1x128xf32, #tpu.memory_space<vmem>>, vector<1x128xf32>
    %35 = arith.addf %33, %34 : vector<1x128xf32>
    %cst_30 = arith.constant 0.000000e+00 : f32
    %36 = vector.broadcast %cst_30 : f32 to vector<1x128xf32>
    %37 = arith.maximumf %35, %36 : vector<1x128xf32>
    %c0_31 = arith.constant 0 : index
    %c0_32 = arith.constant 0 : index
    %38 = vector.load %arg10[%c0_31, %c0_32] : memref<16x128xf32, #tpu.memory_space<vmem>>, vector<16x128xf32>
    %cst_33 = arith.constant dense<0.000000e+00> : vector<1x128xf32>
    %39 = tpu.matmul %24, %38, %cst_33 {dimension_numbers = #tpu.dot_dimension_numbers<[1], [0], [0], [1], [0, 0, 1, 1], [], []>} : vector<1x16xf32>, vector<16x128xf32>, vector<1x128xf32> -> vector<1x128xf32>
    %c0_34 = arith.constant 0 : index
    %c0_35 = arith.constant 0 : index
    %40 = vector.load %arg11[%c0_34, %c0_35] : memref<1x128xf32, #tpu.memory_space<vmem>>, vector<1x128xf32>
    %41 = arith.addf %39, %40 : vector<1x128xf32>
    %cst_36 = arith.constant 0.000000e+00 : f32
    %42 = vector.broadcast %cst_36 : f32 to vector<1x128xf32>
    %43 = arith.maximumf %41, %42 : vector<1x128xf32>
    %c0_37 = arith.constant 0 : index
    %c0_38 = arith.constant 0 : index
    %44 = vector.load %arg12[%c0_37, %c0_38] : memref<128x1xf32, #tpu.memory_space<vmem>>, vector<128x1xf32>
    %cst_39 = arith.constant dense<0.000000e+00> : vector<1x1xf32>
    %45 = tpu.matmul %37, %44, %cst_39 {dimension_numbers = #tpu.dot_dimension_numbers<[1], [0], [0], [1], [0, 0, 1, 1], [], []>} : vector<1x128xf32>, vector<128x1xf32>, vector<1x1xf32> -> vector<1x1xf32>
    %c0_40 = arith.constant 0 : index
    %c0_41 = arith.constant 0 : index
    %46 = vector.load %arg13[%c0_40, %c0_41] : memref<128x1xf32, #tpu.memory_space<vmem>>, vector<128x1xf32>
    %cst_42 = arith.constant dense<0.000000e+00> : vector<1x1xf32>
    %47 = tpu.matmul %43, %46, %cst_42 {dimension_numbers = #tpu.dot_dimension_numbers<[1], [0], [0], [1], [0, 0, 1, 1], [], []>} : vector<1x128xf32>, vector<128x1xf32>, vector<1x1xf32> -> vector<1x1xf32>
    %48 = arith.addf %45, %47 : vector<1x1xf32>
    %c0_43 = arith.constant 0 : index
    %c0_44 = arith.constant 0 : index
    %49 = vector.load %arg14[%c0_43, %c0_44] : memref<1x1xf32, #tpu.memory_space<vmem>>, vector<1x1xf32>
    %50 = arith.addf %48, %49 : vector<1x1xf32>
    %c0_45 = arith.constant 0 : index
    %c0_46 = arith.constant 0 : index
    %c0_47 = arith.constant 0 : index
    %51 = vector.load %arg16[%c0_45, %c0_46, %c0_47] : memref<1x1x1xf32, #tpu.memory_space<vmem>>, vector<1x1x1xf32>
    %52 = vector.shape_cast %51 : vector<1x1x1xf32> to vector<1x1xf32>
    %53 = vector.shape_cast %50 : vector<1x1xf32> to vector<1x1x1xf32>
    tpu.vector_store %arg16[%c0_45, %c0_46, %c0_47], %53 {strides = array<i32>} : memref<1x1x1xf32, #tpu.memory_space<vmem>>, vector<1x1x1xf32>,
    return
  }
  func.func @transform_0(%arg0: i32) -> (i32, i32, i32) {
    %c0_i32 = arith.constant 0 : i32
    %c0_i32_0 = arith.constant 0 : i32
    %c0_i32_1 = arith.constant 0 : i32
    return %arg0, %c0_i32, %c0_i32_0 : i32, i32, i32
  }
  func.func @transform_1(%arg0: i32) -> (i32, i32) {
    %c0_i32 = arith.constant 0 : i32
    %c0_i32_0 = arith.constant 0 : i32
    %c0_i32_1 = arith.constant 0 : i32
    return %c0_i32, %c0_i32_0 : i32, i32
  }
  func.func @transform_2(%arg0: i32) -> (i32, i32) {
    %c0_i32 = arith.constant 0 : i32
    %c0_i32_0 = arith.constant 0 : i32
    %c0_i32_1 = arith.constant 0 : i32
    return %c0_i32, %c0_i32_0 : i32, i32
  }
  func.func @transform_3(%arg0: i32) -> (i32, i32) {
    %c0_i32 = arith.constant 0 : i32
    %c0_i32_0 = arith.constant 0 : i32
    %c0_i32_1 = arith.constant 0 : i32
    return %c0_i32, %c0_i32_0 : i32, i32
  }
  func.func @transform_4(%arg0: i32) -> (i32, i32) {
    %c0_i32 = arith.constant 0 : i32
    %c0_i32_0 = arith.constant 0 : i32
    %c0_i32_1 = arith.constant 0 : i32
    return %c0_i32, %c0_i32_0 : i32, i32
  }
  func.func @transform_5(%arg0: i32) -> (i32, i32) {
    %c0_i32 = arith.constant 0 : i32
    %c0_i32_0 = arith.constant 0 : i32
    %c0_i32_1 = arith.constant 0 : i32
    return %c0_i32, %c0_i32_0 : i32, i32
  }
  func.func @transform_6(%arg0: i32) -> (i32, i32) {
    %c0_i32 = arith.constant 0 : i32
    %c0_i32_0 = arith.constant 0 : i32
    %c0_i32_1 = arith.constant 0 : i32
    return %c0_i32, %c0_i32_0 : i32, i32
  }
  func.func @transform_7(%arg0: i32) -> (i32, i32) {
    %c0_i32 = arith.constant 0 : i32
    %c0_i32_0 = arith.constant 0 : i32
    %c0_i32_1 = arith.constant 0 : i32
    return %c0_i32, %c0_i32_0 : i32, i32
  }
  func.func @transform_8(%arg0: i32) -> (i32, i32) {
    %c0_i32 = arith.constant 0 : i32
    %c0_i32_0 = arith.constant 0 : i32
    %c0_i32_1 = arith.constant 0 : i32
    return %c0_i32, %c0_i32_0 : i32, i32
  }
  func.func @transform_9(%arg0: i32) -> (i32, i32) {
    %c0_i32 = arith.constant 0 : i32
    %c0_i32_0 = arith.constant 0 : i32
    %c0_i32_1 = arith.constant 0 : i32
    return %c0_i32, %c0_i32_0 : i32, i32
  }
  func.func @transform_10(%arg0: i32) -> (i32, i32) {
    %c0_i32 = arith.constant 0 : i32
    %c0_i32_0 = arith.constant 0 : i32
    %c0_i32_1 = arith.constant 0 : i32
    return %c0_i32, %c0_i32_0 : i32, i32
  }
  func.func @transform_11(%arg0: i32) -> (i32, i32) {
    %c0_i32 = arith.constant 0 : i32
    %c0_i32_0 = arith.constant 0 : i32
    %c0_i32_1 = arith.constant 0 : i32
    return %c0_i32, %c0_i32_0 : i32, i32
  }
  func.func @transform_12(%arg0: i32) -> (i32, i32) {
    %c0_i32 = arith.constant 0 : i32
    %c0_i32_0 = arith.constant 0 : i32
    %c0_i32_1 = arith.constant 0 : i32
    return %c0_i32, %c0_i32_0 : i32, i32
  }
  func.func @transform_13(%arg0: i32) -> (i32, i32) {
    %c0_i32 = arith.constant 0 : i32
    %c0_i32_0 = arith.constant 0 : i32
    %c0_i32_1 = arith.constant 0 : i32
    return %c0_i32, %c0_i32_0 : i32, i32
  }
  func.func @transform_14(%arg0: i32) -> (i32, i32, i32) {
    %c0_i32 = arith.constant 0 : i32
    %c0_i32_0 = arith.constant 0 : i32
    %c0_i32_1 = arith.constant 0 : i32
    return %arg0, %c0_i32, %c0_i32_0 : i32, i32, i32
  }
  func.func @transform_15(%arg0: i32) -> (i32, i32, i32) {
    %c0_i32 = arith.constant 0 : i32
    %c0_i32_0 = arith.constant 0 : i32
    %c0_i32_1 = arith.constant 0 : i32
    return %arg0, %c0_i32, %c0_i32_0 : i32, i32, i32
  }
}

</mosaic_0001>

<llo_original>
// kernel: tpu_custom_call.1
$region0: #{tpu_custom_call.1}
  #allocation0 [shape = 'u32[]', space=smem, size = 0x4, offset = 0x4, fixed_abs, tag = 'smem constant byte address 0x4 - core index']
  #allocation1 [shape = 'u32[144,128]{1,0:T(1,128)}', space=vmem, size = 0x12000, scoped, tag = 'internal scratch']
  #allocation2 [shape = 'f32[1,1]{1,0:T(1,128)S(1)}', space=vmem, size = 0x200, scoped, tag = 'scoped memory for tpu_custom_call.1']
  %s0 = inlined_call_operand.vmem [shape: f32[2,4,256], index: 0, kind: input, shape index: {}]
  %s1 = inlined_call_operand.vmem [shape: f32[8,4], index: 1, kind: input, shape index: {}]
  %s2 = inlined_call_operand.vmem [shape: f32[8,1], index: 2, kind: input, shape index: {}]
  %s3 = inlined_call_operand.vmem [shape: f32[16,8], index: 3, kind: input, shape index: {}]
  %s4 = inlined_call_operand.vmem [shape: f32[16,1], index: 4, kind: input, shape index: {}]
  %s5 = inlined_call_operand.vmem [shape: f32[16,10], index: 5, kind: input, shape index: {}]
  %s6 = inlined_call_operand.vmem [shape: f32[1,10], index: 6, kind: input, shape index: {}]
  %s7 = inlined_call_operand.vmem [shape: f32[8,128], index: 7, kind: input, shape index: {}]
  %s8 = inlined_call_operand.vmem [shape: f32[1,128], index: 8, kind: input, shape index: {}]
  %s9 = inlined_call_operand.vmem [shape: f32[16,128], index: 9, kind: input, shape index: {}]
  %s10 = inlined_call_operand.vmem [shape: f32[1,128], index: 10, kind: input, shape index: {}]
  %s11 = inlined_call_operand.vmem [shape: f32[128,1], index: 11, kind: input, shape index: {}]
  %s12 = inlined_call_operand.vmem [shape: f32[128,1], index: 12, kind: input, shape index: {}]
  %s13 = inlined_call_operand.<no memory space> [shape: f32[1,1], index: 13, kind: input, shape index: {}]
  %s14 = inlined_call_operand.hbm [shape: f32[2,1,10], index: 14, kind: output, shape index: {0}]
  %s15 = inlined_call_operand.vmem [shape: f32[2,1,1], index: 15, kind: output, shape index: {1}]
  %16 = xla_tuple %s14, %s15
  %s17 = sld [smem:[#allocation0]]
  $region97: #{tpu_custom_call.1} parent=0
    _
  %s19 = ssub.s32 1, %s17
  %s20 = scalar_select 0, %s19, %s17
  %v21 = vstv %s13
  %22 = vst [vmem:[#allocation2] sm:$0x1] %v21
  $region1: #{tpu_custom_call.1} parent=0
    #allocation3 [shape = 'u8[1024]{0}', space=vmem, size = 0x400, scoped, tag = 'output window, operand 0']
    #allocation4 [shape = 's32[2]{0}', space=sflag, size = 0x8, scoped, tag = 'scoped memory for tpu_custom_call.1']
    %23 = vsyncpa [#allocation4], 0
    %s24 = scalar_lea.sflag [#allocation4], 1
    %25 = vsyncpa %s24, 0
    loop: start=0, step=1, limit=4
    $region2: #{tpu_custom_call.1} parent=1 // loop_pre_header
      _
    $region3: #{tpu_custom_call.1} parent=1 // loop_header
      %s27 = sphi 0, %s31
      %p28 = scmp.ge.s32.totalorder %s27, 4
      %s37 = sphi 0, %s39
      %s40 = sphi 0, %s37
      %s41 = sphi 0, %s40
      %s57 = sphi 0, %s41
      %s61 = sphi 0, %s61
      %s63 = sphi 0, %s61
      %s64 = sphi 0, %s63
      %s78 = sphi 0, %s64
      %s82 = sphi 0, %s82
      %s84 = sphi 0, %s82
      %s85 = sphi 0, %s84
      %s99 = sphi 0, %s85
      %s103 = sphi 0, %s103
      %s105 = sphi 0, %s103
      %s106 = sphi 0, %s105
      %s120 = sphi 0, %s106
      %s124 = sphi 0, %s124
      %s126 = sphi 0, %s124
      %s127 = sphi 0, %s126
      %s141 = sphi 0, %s127
      %s145 = sphi 0, %s145
      %s147 = sphi 0, %s145
      %s148 = sphi 0, %s147
      %s162 = sphi 0, %s148
      %s166 = sphi 0, %s166
      %s168 = sphi 0, %s166
      %s169 = sphi 0, %s168
      %s183 = sphi 0, %s169
      %s187 = sphi 0, %s187
      %s189 = sphi 0, %s187
      %s190 = sphi 0, %s189
      %s204 = sphi 0, %s190
      %s208 = sphi 0, %s208
      %s210 = sphi 0, %s208
      %s211 = sphi 0, %s210
      %s225 = sphi 0, %s211
      %s229 = sphi 0, %s229
      %s231 = sphi 0, %s229
      %s232 = sphi 0, %s231
      %s246 = sphi 0, %s232
      %s250 = sphi 0, %s250
      %s252 = sphi 0, %s250
      %s253 = sphi 0, %s252
      %s267 = sphi 0, %s253
      %s271 = sphi 0, %s271
      %s273 = sphi 0, %s271
      %s274 = sphi 0, %s273
      %s288 = sphi 0, %s274
      %s292 = sphi 0, %s292
      %s294 = sphi 0, %s292
      %s295 = sphi 0, %s294
      %s309 = sphi 0, %s295
      %s313 = sphi 0, %s313
      %s315 = sphi 0, %s313
      %s316 = sphi 0, %s315
      %s330 = sphi 0, %s316
      %s336 = sphi 0, %s338
      %s339 = sphi 0, %s336
      %s340 = sphi 0, %s339
      %s356 = sphi 0, %s340
      %s362 = sphi 0, %s364
      %s365 = sphi 0, %s362
      %s366 = sphi 0, %s365
      %s382 = sphi 0, %s366
    $region4: #{tpu_custom_call.1} parent=1 // loop_header_branch
      %30 = sbr.rel (%p28) target = $region8
    $region5: #{tpu_custom_call.1} parent=1 // loop_body
      %s32 = ssub.s32 %s27, 1
      %s33 = ssub.s32 %s27, 2
      %s34 = sadd.s32 %s27, 1
      %s35 = ssub.s32 %s27, %s34
      %p36 = scmp.eq.s32.totalorder %s35, 0
      %s38 = sadd.s32 %s37, 1
      %s39 = scalar_select %p36, %s37, %s38
      %p42 = pneg %p36
      %p43 = scmp.eq.s32.totalorder %s27, 1
      %p44 = por %p42, %p43
      %p45 = scmp.ne.s32.totalorder %s37, %s40
      %p46 = scmp.eq.s32.totalorder %s27, 0
      %p47 = por %p45, %p46
      %p48 = scmp.ne.s32.totalorder %s37, %s40
      %p49 = scmp.eq.s32.totalorder %s32, 1
      %p50 = por %p48, %p49
      %p51 = scmp.ne.s32.totalorder %s40, %s41
      %p52 = scmp.eq.s32.totalorder %s32, 0
      %p53 = por %p51, %p52
      %p54 = scmp.ne.s32.totalorder %s40, %s41
      %p55 = scmp.eq.s32.totalorder %s33, 1
      %p56 = por %p54, %p55
      %p58 = scmp.ne.s32.totalorder %s41, %s57
      %p59 = scmp.eq.s32.totalorder %s33, 0
      %p60 = por %p58, %p59
      %s62 = sadd.s32 %s61, 1
      %p65 = scmp.eq.s32.totalorder %s27, 1
      %p66 = scmp.ne.s32.totalorder %s61, %s63
      %p67 = scmp.eq.s32.totalorder %s27, 0
      %p68 = por %p66, %p67
      %p69 = scmp.ne.s32.totalorder %s61, %s63
      %p70 = scmp.eq.s32.totalorder %s32, 1
      %p71 = por %p69, %p70
      %p72 = scmp.ne.s32.totalorder %s63, %s64
      %p73 = scmp.eq.s32.totalorder %s32, 0
      %p74 = por %p72, %p73
      %p75 = scmp.ne.s32.totalorder %s63, %s64
      %p76 = scmp.eq.s32.totalorder %s33, 1
      %p77 = por %p75, %p76
      %p79 = scmp.ne.s32.totalorder %s64, %s78
      %p80 = scmp.eq.s32.totalorder %s33, 0
      %p81 = por %p79, %p80
      %s83 = sadd.s32 %s82, 1
      %p86 = scmp.eq.s32.totalorder %s27, 1
      %p87 = scmp.ne.s32.totalorder %s82, %s84
      %p88 = scmp.eq.s32.totalorder %s27, 0
      %p89 = por %p87, %p88
      %p90 = scmp.ne.s32.totalorder %s82, %s84
      %p91 = scmp.eq.s32.totalorder %s32, 1
      %p92 = por %p90, %p91
      %p93 = scmp.ne.s32.totalorder %s84, %s85
      %p94 = scmp.eq.s32.totalorder %s32, 0
      %p95 = por %p93, %p94
      %p96 = scmp.ne.s32.totalorder %s84, %s85
      %p97 = scmp.eq.s32.totalorder %s33, 1
      %p98 = por %p96, %p97
      %p100 = scmp.ne.s32.totalorder %s85, %s99
      %p101 = scmp.eq.s32.totalorder %s33, 0
      %p102 = por %p100, %p101
      %s104 = sadd.s32 %s103, 1
      %p107 = scmp.eq.s32.totalorder %s27, 1
      %p108 = scmp.ne.s32.totalorder %s103, %s105
      %p109 = scmp.eq.s32.totalorder %s27, 0
      %p110 = por %p108, %p109
      %p111 = scmp.ne.s32.totalorder %s103, %s105
      %p112 = scmp.eq.s32.totalorder %s32, 1
      %p113 = por %p111, %p112
      %p114 = scmp.ne.s32.totalorder %s105, %s106
      %p115 = scmp.eq.s32.totalorder %s32, 0
      %p116 = por %p114, %p115
      %p117 = scmp.ne.s32.totalorder %s105, %s106
      %p118 = scmp.eq.s32.totalorder %s33, 1
      %p119 = por %p117, %p118
      %p121 = scmp.ne.s32.totalorder %s106, %s120
      %p122 = scmp.eq.s32.totalorder %s33, 0
      %p123 = por %p121, %p122
      %s125 = sadd.s32 %s124, 1
      %p128 = scmp.eq.s32.totalorder %s27, 1
      %p129 = scmp.ne.s32.totalorder %s124, %s126
      %p130 = scmp.eq.s32.totalorder %s27, 0
      %p131 = por %p129, %p130
      %p132 = scmp.ne.s32.totalorder %s124, %s126
      %p133 = scmp.eq.s32.totalorder %s32, 1
      %p134 = por %p132, %p133
      %p135 = scmp.ne.s32.totalorder %s126, %s127
      %p136 = scmp.eq.s32.totalorder %s32, 0
      %p137 = por %p135, %p136
      %p138 = scmp.ne.s32.totalorder %s126, %s127
      %p139 = scmp.eq.s32.totalorder %s33, 1
      %p140 = por %p138, %p139
      %p142 = scmp.ne.s32.totalorder %s127, %s141
      %p143 = scmp.eq.s32.totalorder %s33, 0
      %p144 = por %p142, %p143
      %s146 = sadd.s32 %s145, 1
      %p149 = scmp.eq.s32.totalorder %s27, 1
      %p150 = scmp.ne.s32.totalorder %s145, %s147
      %p151 = scmp.eq.s32.totalorder %s27, 0
      %p152 = por %p150, %p151
      %p153 = scmp.ne.s32.totalorder %s145, %s147
      %p154 = scmp.eq.s32.totalorder %s32, 1
      %p155 = por %p153, %p154
      %p156 = scmp.ne.s32.totalorder %s147, %s148
      %p157 = scmp.eq.s32.totalorder %s32, 0
      %p158 = por %p156, %p157
      %p159 = scmp.ne.s32.totalorder %s147, %s148
      %p160 = scmp.eq.s32.totalorder %s33, 1
      %p161 = por %p159, %p160
      %p163 = scmp.ne.s32.totalorder %s148, %s162
      %p164 = scmp.eq.s32.totalorder %s33, 0
      %p165 = por %p163, %p164
      %s167 = sadd.s32 %s166, 1
      %p170 = scmp.eq.s32.totalorder %s27, 1
      %p171 = scmp.ne.s32.totalorder %s166, %s168
      %p172 = scmp.eq.s32.totalorder %s27, 0
      %p173 = por %p171, %p172
      %p174 = scmp.ne.s32.totalorder %s166, %s168
      %p175 = scmp.eq.s32.totalorder %s32, 1
      %p176 = por %p174, %p175
      %p177 = scmp.ne.s32.totalorder %s168, %s169
      %p178 = scmp.eq.s32.totalorder %s32, 0
      %p179 = por %p177, %p178
      %p180 = scmp.ne.s32.totalorder %s168, %s169
      %p181 = scmp.eq.s32.totalorder %s33, 1
      %p182 = por %p180, %p181
      %p184 = scmp.ne.s32.totalorder %s169, %s183
      %p185 = scmp.eq.s32.totalorder %s33, 0
      %p186 = por %p184, %p185
      %s188 = sadd.s32 %s187, 1
      %p191 = scmp.eq.s32.totalorder %s27, 1
      %p192 = scmp.ne.s32.totalorder %s187, %s189
      %p193 = scmp.eq.s32.totalorder %s27, 0
      %p194 = por %p192, %p193
      %p195 = scmp.ne.s32.totalorder %s187, %s189
      %p196 = scmp.eq.s32.totalorder %s32, 1
      %p197 = por %p195, %p196
      %p198 = scmp.ne.s32.totalorder %s189, %s190
      %p199 = scmp.eq.s32.totalorder %s32, 0
      %p200 = por %p198, %p199
      %p201 = scmp.ne.s32.totalorder %s189, %s190
      %p202 = scmp.eq.s32.totalorder %s33, 1
      %p203 = por %p201, %p202
      %p205 = scmp.ne.s32.totalorder %s190, %s204
      %p206 = scmp.eq.s32.totalorder %s33, 0
      %p207 = por %p205, %p206
      %s209 = sadd.s32 %s208, 1
      %p212 = scmp.eq.s32.totalorder %s27, 1
      %p213 = scmp.ne.s32.totalorder %s208, %s210
      %p214 = scmp.eq.s32.totalorder %s27, 0
      %p215 = por %p213, %p214
      %p216 = scmp.ne.s32.totalorder %s208, %s210
      %p217 = scmp.eq.s32.totalorder %s32, 1
      %p218 = por %p216, %p217
      %p219 = scmp.ne.s32.totalorder %s210, %s211
      %p220 = scmp.eq.s32.totalorder %s32, 0
      %p221 = por %p219, %p220
      %p222 = scmp.ne.s32.totalorder %s210, %s211
      %p223 = scmp.eq.s32.totalorder %s33, 1
      %p224 = por %p222, %p223
      %p226 = scmp.ne.s32.totalorder %s211, %s225
      %p227 = scmp.eq.s32.totalorder %s33, 0
      %p228 = por %p226, %p227
      %s230 = sadd.s32 %s229, 1
      %p233 = scmp.eq.s32.totalorder %s27, 1
      %p234 = scmp.ne.s32.totalorder %s229, %s231
      %p235 = scmp.eq.s32.totalorder %s27, 0
      %p236 = por %p234, %p235
      %p237 = scmp.ne.s32.totalorder %s229, %s231
      %p238 = scmp.eq.s32.totalorder %s32, 1
      %p239 = por %p237, %p238
      %p240 = scmp.ne.s32.totalorder %s231, %s232
      %p241 = scmp.eq.s32.totalorder %s32, 0
      %p242 = por %p240, %p241
      %p243 = scmp.ne.s32.totalorder %s231, %s232
      %p244 = scmp.eq.s32.totalorder %s33, 1
      %p245 = por %p243, %p244
      %p247 = scmp.ne.s32.totalorder %s232, %s246
      %p248 = scmp.eq.s32.totalorder %s33, 0
      %p249 = por %p247, %p248
      %s251 = sadd.s32 %s250, 1
      %p254 = scmp.eq.s32.totalorder %s27, 1
      %p255 = scmp.ne.s32.totalorder %s250, %s252
      %p256 = scmp.eq.s32.totalorder %s27, 0
      %p257 = por %p255, %p256
      %p258 = scmp.ne.s32.totalorder %s250, %s252
      %p259 = scmp.eq.s32.totalorder %s32, 1
      %p260 = por %p258, %p259
      %p261 = scmp.ne.s32.totalorder %s252, %s253
      %p262 = scmp.eq.s32.totalorder %s32, 0
      %p263 = por %p261, %p262
      %p264 = scmp.ne.s32.totalorder %s252, %s253
      %p265 = scmp.eq.s32.totalorder %s33, 1
      %p266 = por %p264, %p265
      %p268 = scmp.ne.s32.totalorder %s253, %s267
      %p269 = scmp.eq.s32.totalorder %s33, 0
      %p270 = por %p268, %p269
      %s272 = sadd.s32 %s271, 1
      %p275 = scmp.eq.s32.totalorder %s27, 1
      %p276 = scmp.ne.s32.totalorder %s271, %s273
      %p277 = scmp.eq.s32.totalorder %s27, 0
      %p278 = por %p276, %p277
      %p279 = scmp.ne.s32.totalorder %s271, %s273
      %p280 = scmp.eq.s32.totalorder %s32, 1
      %p281 = por %p279, %p280
      %p282 = scmp.ne.s32.totalorder %s273, %s274
      %p283 = scmp.eq.s32.totalorder %s32, 0
      %p284 = por %p282, %p283
      %p285 = scmp.ne.s32.totalorder %s273, %s274
      %p286 = scmp.eq.s32.totalorder %s33, 1
      %p287 = por %p285, %p286
      %p289 = scmp.ne.s32.totalorder %s274, %s288
      %p290 = scmp.eq.s32.totalorder %s33, 0
      %p291 = por %p289, %p290
      %s293 = sadd.s32 %s292, 1
      %p296 = scmp.eq.s32.totalorder %s27, 1
      %p297 = scmp.ne.s32.totalorder %s292, %s294
      %p298 = scmp.eq.s32.totalorder %s27, 0
      %p299 = por %p297, %p298
      %p300 = scmp.ne.s32.totalorder %s292, %s294
      %p301 = scmp.eq.s32.totalorder %s32, 1
      %p302 = por %p300, %p301
      %p303 = scmp.ne.s32.totalorder %s294, %s295
      %p304 = scmp.eq.s32.totalorder %s32, 0
      %p305 = por %p303, %p304
      %p306 = scmp.ne.s32.totalorder %s294, %s295
      %p307 = scmp.eq.s32.totalorder %s33, 1
      %p308 = por %p306, %p307
      %p310 = scmp.ne.s32.totalorder %s295, %s309
      %p311 = scmp.eq.s32.totalorder %s33, 0
      %p312 = por %p310, %p311
      %s314 = sadd.s32 %s313, 1
      %p317 = scmp.eq.s32.totalorder %s27, 1
      %p318 = scmp.ne.s32.totalorder %s313, %s315
      %p319 = scmp.eq.s32.totalorder %s27, 0
      %p320 = por %p318, %p319
      %p321 = scmp.ne.s32.totalorder %s313, %s315
      %p322 = scmp.eq.s32.totalorder %s32, 1
      %p323 = por %p321, %p322
      %p324 = scmp.ne.s32.totalorder %s315, %s316
      %p325 = scmp.eq.s32.totalorder %s32, 0
      %p326 = por %p324, %p325
      %p327 = scmp.ne.s32.totalorder %s315, %s316
      %p328 = scmp.eq.s32.totalorder %s33, 1
      %p329 = por %p327, %p328
      %p331 = scmp.ne.s32.totalorder %s316, %s330
      %p332 = scmp.eq.s32.totalorder %s33, 0
      %p333 = por %p331, %p332
      %s334 = ssub.s32 %s27, %s34
      %p335 = scmp.eq.s32.totalorder %s334, 0
      %s337 = sadd.s32 %s336, 1
      %s338 = scalar_select %p335, %s336, %s337
      %p341 = pneg %p335
      %p342 = scmp.eq.s32.totalorder %s27, 1
      %p343 = por %p341, %p342
      %p344 = scmp.ne.s32.totalorder %s336, %s339
      %p345 = scmp.eq.s32.totalorder %s27, 0
      %p346 = por %p344, %p345
      %p347 = scmp.ne.s32.totalorder %s336, %s339
      %p348 = scmp.eq.s32.totalorder %s32, 1
      %p349 = por %p347, %p348
      %p350 = scmp.ne.s32.totalorder %s339, %s340
      %p351 = scmp.eq.s32.totalorder %s32, 0
      %p352 = por %p350, %p351
      %p353 = scmp.ne.s32.totalorder %s339, %s340
      %p354 = scmp.eq.s32.totalorder %s33, 1
      %p355 = por %p353, %p354
      %p357 = scmp.ne.s32.totalorder %s340, %s356
      %p358 = scmp.eq.s32.totalorder %s33, 0
      %p359 = por %p357, %p358
      %s360 = ssub.s32 %s27, %s34
      %p361 = scmp.eq.s32.totalorder %s360, 0
      %s363 = sadd.s32 %s362, 1
      %s364 = scalar_select %p361, %s362, %s363
      %p367 = pneg %p361
      %p368 = scmp.eq.s32.totalorder %s27, 1
      %p369 = por %p367, %p368
      %p370 = scmp.ne.s32.totalorder %s362, %s365
      %p371 = scmp.eq.s32.totalorder %s27, 0
      %p372 = por %p370, %p371
      %p373 = scmp.ne.s32.totalorder %s362, %s365
      %p374 = scmp.eq.s32.totalorder %s32, 1
      %p375 = por %p373, %p374
      %p376 = scmp.ne.s32.totalorder %s365, %s366
      %p377 = scmp.eq.s32.totalorder %s32, 0
      %p378 = por %p376, %p377
      %p379 = scmp.ne.s32.totalorder %s365, %s366
      %p380 = scmp.eq.s32.totalorder %s33, 1
      %p381 = por %p379, %p380
      %p383 = scmp.ne.s32.totalorder %s366, %s382
      %p384 = scmp.eq.s32.totalorder %s33, 0
      %p385 = por %p383, %p384
      %p386 = scmp.le.s32.totalorder 1, %s27
      %p387 = scmp.lt.s32.totalorder %s27, 3
      %p388 = pnand %p386, %p387
      %p389 = pneg %p388
      // Predicated region
      $region9: #{tpu_custom_call.1} parent=5 // pred_check
        _
      $region10: #{tpu_custom_call.1} parent=5 // pred_check_branch
        %391 = sbr.rel (%p388) target = $region12
      $region11: #{tpu_custom_call.1} parent=5 // pred_region
        %s392 = ssub.s32 %s27, 1
        // Predicated region
        $region13: #{tpu_custom_call.1} parent=11 // pred_check
          %p393 = pneg %p74
        $region14: #{tpu_custom_call.1} parent=11 // pred_check_branch
          %395 = sbr.rel (%p393) target = $region16
        $region15: #{tpu_custom_call.1} parent=11 // pred_region
          _
        $region16: #{tpu_custom_call.1} parent=11 // pred_fallthru
          _
        // Predicated region
        $region17: #{tpu_custom_call.1} parent=11 // pred_check
          %p396 = pneg %p95
        $region18: #{tpu_custom_call.1} parent=11 // pred_check_branch
          %398 = sbr.rel (%p396) target = $region20
        $region19: #{tpu_custom_call.1} parent=11 // pred_region
          _
        $region20: #{tpu_custom_call.1} parent=11 // pred_fallthru
          _
        // Predicated region
        $region21: #{tpu_custom_call.1} parent=11 // pred_check
          %p399 = pneg %p116
        $region22: #{tpu_custom_call.1} parent=11 // pred_check_branch
          %401 = sbr.rel (%p399) target = $region24
        $region23: #{tpu_custom_call.1} parent=11 // pred_region
          _
        $region24: #{tpu_custom_call.1} parent=11 // pred_fallthru
          _
        // Predicated region
        $region25: #{tpu_custom_call.1} parent=11 // pred_check
          %p402 = pneg %p137
        $region26: #{tpu_custom_call.1} parent=11 // pred_check_branch
          %404 = sbr.rel (%p402) target = $region28
        $region27: #{tpu_custom_call.1} parent=11 // pred_region
          _
        $region28: #{tpu_custom_call.1} parent=11 // pred_fallthru
          _
        // Predicated region
        $region29: #{tpu_custom_call.1} parent=11 // pred_check
          %p405 = pneg %p158
        $region30: #{tpu_custom_call.1} parent=11 // pred_check_branch
          %407 = sbr.rel (%p405) target = $region32
        $region31: #{tpu_custom_call.1} parent=11 // pred_region
          _
        $region32: #{tpu_custom_call.1} parent=11 // pred_fallthru
          _
        // Predicated region
        $region33: #{tpu_custom_call.1} parent=11 // pred_check
          %p408 = pneg %p179
        $region34: #{tpu_custom_call.1} parent=11 // pred_check_branch
          %410 = sbr.rel (%p408) target = $region36
        $region35: #{tpu_custom_call.1} parent=11 // pred_region
          _
        $region36: #{tpu_custom_call.1} parent=11 // pred_fallthru
          _
        // Predicated region
        $region37: #{tpu_custom_call.1} parent=11 // pred_check
          %p411 = pneg %p200
        $region38: #{tpu_custom_call.1} parent=11 // pred_check_branch
          %413 = sbr.rel (%p411) target = $region40
        $region39: #{tpu_custom_call.1} parent=11 // pred_region
          _
        $region40: #{tpu_custom_call.1} parent=11 // pred_fallthru
          _
        // Predicated region
        $region41: #{tpu_custom_call.1} parent=11 // pred_check
          %p414 = pneg %p221
        $region42: #{tpu_custom_call.1} parent=11 // pred_check_branch
          %416 = sbr.rel (%p414) target = $region44
        $region43: #{tpu_custom_call.1} parent=11 // pred_region
          _
        $region44: #{tpu_custom_call.1} parent=11 // pred_fallthru
          _
        // Predicated region
        $region45: #{tpu_custom_call.1} parent=11 // pred_check
          %p417 = pneg %p242
        $region46: #{tpu_custom_call.1} parent=11 // pred_check_branch
          %419 = sbr.rel (%p417) target = $region48
        $region47: #{tpu_custom_call.1} parent=11 // pred_region
          _
        $region48: #{tpu_custom_call.1} parent=11 // pred_fallthru
          _
        // Predicated region
        $region49: #{tpu_custom_call.1} parent=11 // pred_check
          %p420 = pneg %p263
        $region50: #{tpu_custom_call.1} parent=11 // pred_check_branch
          %422 = sbr.rel (%p420) target = $region52
        $region51: #{tpu_custom_call.1} parent=11 // pred_region
          _
        $region52: #{tpu_custom_call.1} parent=11 // pred_fallthru
          _
        // Predicated region
        $region53: #{tpu_custom_call.1} parent=11 // pred_check
          %p423 = pneg %p284
        $region54: #{tpu_custom_call.1} parent=11 // pred_check_branch
          %425 = sbr.rel (%p423) target = $region56
        $region55: #{tpu_custom_call.1} parent=11 // pred_region
          _
        $region56: #{tpu_custom_call.1} parent=11 // pred_fallthru
          _
        // Predicated region
        $region57: #{tpu_custom_call.1} parent=11 // pred_check
          %p426 = pneg %p305
        $region58: #{tpu_custom_call.1} parent=11 // pred_check_branch
          %428 = sbr.rel (%p426) target = $region60
        $region59: #{tpu_custom_call.1} parent=11 // pred_region
          _
        $region60: #{tpu_custom_call.1} parent=11 // pred_fallthru
          _
        // Predicated region
        $region61: #{tpu_custom_call.1} parent=11 // pred_check
          %p429 = pneg %p326
        $region62: #{tpu_custom_call.1} parent=11 // pred_check_branch
          %431 = sbr.rel (%p429) target = $region64
        $region63: #{tpu_custom_call.1} parent=11 // pred_region
          _
        $region64: #{tpu_custom_call.1} parent=11 // pred_fallthru
          _
      $region12: #{tpu_custom_call.1} parent=5 // pred_fallthru
        _
      %p432 = scmp.lt.s32.totalorder %s27, 2
      // Predicated region
      $region65: #{tpu_custom_call.1} parent=5 // pred_check
        %p433 = pneg %p432
      $region66: #{tpu_custom_call.1} parent=5 // pred_check_branch
        %435 = sbr.rel (%p433) target = $region68
      $region67: #{tpu_custom_call.1} parent=5 // pred_region
        // Predicated region
        $region69: #{tpu_custom_call.1} parent=67 // pred_check
          %p436 = pneg %p47
        $region70: #{tpu_custom_call.1} parent=67 // pred_check_branch
          %438 = sbr.rel (%p436) target = $region72
        $region71: #{tpu_custom_call.1} parent=67 // pred_region
          %p439 = scmp.lt.s32.totalorder %s27, 1
          %s440 = scalar_select %p439, %s27, 1
          %s441 = smul.addr %s440, 2
          %s442 = smul.addr %s441, 4
          %s443 = scalar_lea.vmem %s0, %s442
        $region72: #{tpu_custom_call.1} parent=67 // pred_fallthru
          _
      $region68: #{tpu_custom_call.1} parent=5 // pred_fallthru
        _
      %p444 = scmp.le.s32.totalorder 1, %s27
      %p445 = scmp.lt.s32.totalorder %s27, 3
      %p446 = pnand %p444, %p445
      %p447 = pneg %p446
      // Predicated region
      $region73: #{tpu_custom_call.1} parent=5 // pred_check
        _
      $region74: #{tpu_custom_call.1} parent=5 // pred_check_branch
        %449 = sbr.rel (%p446) target = $region76
      $region75: #{tpu_custom_call.1} parent=5 // pred_region
        %s450 = ssub.s32 %s27, 1
        %p451 = scmp.lt.s32.totalorder %s32, 1
        %s452 = scalar_select %p451, %s32, 1
        %s453 = smul.addr %s452, 2
        %s454 = smul.addr %s453, 4
        %s455 = scalar_lea.vmem %s0, %s454
        %p456 = pneg %p53
        %p457 = pneg %p50
        %p458 = pneg %p74
        %p459 = pneg %p71
        %p460 = pneg %p95
        %p461 = pneg %p92
        %p462 = pneg %p116
        %p463 = pneg %p113
        %p464 = pneg %p137
        %p465 = pneg %p134
        %p466 = pneg %p158
        %p467 = pneg %p155
        %p468 = pneg %p179
        %p469 = pneg %p176
        %p470 = pneg %p200
        %p471 = pneg %p197
        %p472 = pneg %p221
        %p473 = pneg %p218
        %p474 = pneg %p242
        %p475 = pneg %p239
        %p476 = pneg %p263
        %p477 = pneg %p260
        %p478 = pneg %p284
        %p479 = pneg %p281
        %p480 = pneg %p305
        %p481 = pneg %p302
        %p482 = pneg %p326
        %p483 = pneg %p323
        %p484 = pneg %p352
        %p485 = pneg %p349
        %s486 = sand.u32 %s339, 1
        %s487 = scalar_lea.sflag [#allocation4], %s486
        %s488 = sand.u32 %s339, 1
        %s489 = scalar_lea.vmem [#allocation3], %s488
        %p490 = pneg %p378
        %p491 = pneg %p375
        %p492 = scmp.lt.s32.totalorder %s32, 1
        %s493 = scalar_select %p492, %s32, 1
        %s494 = scalar_lea.vmem %s15, %s493
        %p495 = scmp.lt.s32.totalorder %s32, 1
        %s496 = scalar_select %p495, %s32, 1
        %s497 = smul.addr %s496, 2
        %s498 = smul.addr %s497, 4
        %s499 = scalar_lea.vmem %s0, %s498
        %p500 = scmp.lt.s32.totalorder %s32, 1
        %s501 = scalar_select %p500, %s32, 1
        %s502 = scalar_lea.vmem %s15, %s501
        %v503 = vld [vmem:[%s499] sm:$0xff]
        %v504 = vld [vmem:[%s1] sm:$0xff]
        %v505 = vld [vmem:[%s2] sm:$0xff]
        %507 = vset.pattern.permute.xlu0 0
        %508 = vperm.xlu0 %507, %v505
        %v509 = vpop.permute.xlu0 %508
        %v512 = vcombine.high %v503, %v503
        %vm513 = vcmask 31744
        %v515 = vsel %vm513, %v504, 0
        %vm517 = vcmask 1043456
        %v518 = vsel %vm517, %v503, 0
        %v520 = vsel %vm517, %v512, 0
        %522 = vmatprep.subr.mxu0 0.0
        %523 = vmatpush1.msra.mxu0 0.0
        %524 = vmatprep.subr.mxu0 0.0
        %525 = vmatpush1.msra.mxu0 0.0
        %526 = vmatprep.subr.mxu0 0.0
        %527 = vmatpush1.msra.mxu0 0.0
        %528 = vmatprep.subr.mxu0 0.0
        %529 = vmatpush1.msra.mxu0 0.0
        %530 = vmatprep.subr.mxu0 0.0
        %531 = vmatpush1.msra.mxu0 0.0
        %532 = vmatprep.subr.mxu0 0.0
        %533 = vmatpush1.msra.mxu0 0.0
        %534 = vmatprep.subr.mxu0 0.0
        %535 = vmatpush1.msra.mxu0 0.0
        %536 = vmatprep.subr.mxu0 0.0
        %537 = vmatpush1.msra.mxu0 0.0
        %538 = vmatprep.subr.mxu0 0.0
        %539 = vmatpush1.msra.mxu0 0.0
        %540 = vmatprep.subr.mxu0 0.0
        %541 = vmatpush1.msra.mxu0 0.0
        %542 = vmatprep.subr.mxu0 0.0
        %543 = vmatpush1.msra.mxu0 0.0
        %544 = vmatprep.subr.mxu0 0.0
        %545 = vmatpush1.msra.mxu0 0.0
        %546 = vmatprep.subr.mxu0 0.0
        %547 = vmatpush1.msra.mxu0 0.0
        %548 = vmatprep.subr.mxu0 0.0
        %549 = vmatpush1.msra.mxu0 0.0
        %550 = vmatprep.subr.mxu0 0.0
        %551 = vmatpush1.msra.mxu0 0.0
        %552 = vmatprep.subr.mxu0 %v520
        %553 = vmatpush1.msra.mxu0 %v518
        %554 = vmatprep.subr.mxu0 0.0
        %555 = vmatpush2.msra.mxu0 0.0
        %556 = vmatprep.subr.mxu0 0.0
        %557 = vmatpush2.msra.mxu0 0.0
        %558 = vmatprep.subr.mxu0 0.0
        %559 = vmatpush2.msra.mxu0 0.0
        %560 = vmatprep.subr.mxu0 0.0
        %561 = vmatpush2.msra.mxu0 0.0
        %562 = vmatprep.subr.mxu0 0.0
        %563 = vmatpush2.msra.mxu0 0.0
        %564 = vmatprep.subr.mxu0 0.0
        %565 = vmatpush2.msra.mxu0 0.0
        %566 = vmatprep.subr.mxu0 0.0
        %567 = vmatpush2.msra.mxu0 0.0
        %568 = vmatprep.subr.mxu0 0.0
        %569 = vmatpush2.msra.mxu0 0.0
        %570 = vmatprep.subr.mxu0 0.0
        %571 = vmatpush2.msra.mxu0 0.0
        %572 = vmatprep.subr.mxu0 0.0
        %573 = vmatpush2.msra.mxu0 0.0
        %574 = vmatprep.subr.mxu0 0.0
        %575 = vmatpush2.msra.mxu0 0.0
        %576 = vmatprep.subr.mxu0 0.0
        %577 = vmatpush2.msra.mxu0 0.0
        %578 = vmatprep.subr.mxu0 0.0
        %579 = vmatpush2.msra.mxu0 0.0
        %580 = vmatprep.subr.mxu0 0.0
        %581 = vmatpush2.msra.mxu0 0.0
        %582 = vmatprep.subr.mxu0 0.0
        %583 = vmatpush2.msra.mxu0 0.0
        %584 = vmatprep.subr.mxu0 0.0
        %585 = vmatpush2.msra.mxu0 0.0
        %586 = vmatprep.mubr.f32.mxu0 0.0
        %587 = vmatmul.mubr.f32.gmra.mxu0 %v515
        %v588 = vpop.f32.mrf.mxu0
        %v589 = vadd.f32 %v509, %v588
        %v590 = vpop.f32.mrf.mxu0
        %v591 = vadd.f32 %v509, %v590
        %592 = vdwg.mxu0
        %v593 = vmax.f32 %v589, 0.0
        %v594 = vmax.f32 %v591, 0.0
        %v595 = vld [vmem:[%s3] sm:$0xff]
        %v596 = vld [vmem:[%s3 + $0x8] sm:$0xff]
        %v597 = vld [vmem:[%s4] sm:$0xff]
        %v598 = vld [vmem:[%s4 + $0x8] sm:$0xff]
        %600 = vset.pattern.permute.xlu0 0
        %601 = vperm.xlu0 %600, %v597
        %v602 = vpop.permute.xlu0 %601
        %605 = vset.pattern.permute.xlu0 0
        %606 = vperm.xlu0 %605, %v598
        %v607 = vpop.permute.xlu0 %606
        %vm609 = vcmask 64512
        %v611 = vsel %vm609, %v595, 0
        %v614 = vsel %vm609, %v596, 0
        %616 = vmatprep.subr.mxu0 0.0
        %617 = vmatpush1.msra.mxu0 0.0
        %618 = vmatprep.subr.mxu0 0.0
        %619 = vmatpush1.msra.mxu0 0.0
        %620 = vmatprep.subr.mxu0 0.0
        %621 = vmatpush1.msra.mxu0 0.0
        %622 = vmatprep.subr.mxu0 0.0
        %623 = vmatpush1.msra.mxu0 0.0
        %624 = vmatprep.subr.mxu0 0.0
        %625 = vmatpush1.msra.mxu0 0.0
        %626 = vmatprep.subr.mxu0 0.0
        %627 = vmatpush1.msra.mxu0 0.0
        %628 = vmatprep.subr.mxu0 0.0
        %629 = vmatpush1.msra.mxu0 0.0
        %630 = vmatprep.subr.mxu0 0.0
        %631 = vmatpush1.msra.mxu0 0.0
        %632 = vmatprep.subr.mxu0 0.0
        %633 = vmatpush1.msra.mxu0 0.0
        %634 = vmatprep.subr.mxu0 0.0
        %635 = vmatpush1.msra.mxu0 0.0
        %636 = vmatprep.subr.mxu0 0.0
        %637 = vmatpush1.msra.mxu0 0.0
        %638 = vmatprep.subr.mxu0 0.0
        %639 = vmatpush1.msra.mxu0 0.0
        %640 = vmatprep.subr.mxu0 0.0
        %641 = vmatpush1.msra.mxu0 0.0
        %642 = vmatprep.subr.mxu0 0.0
        %643 = vmatpush1.msra.mxu0 0.0
        %644 = vmatprep.subr.mxu0 0.0
        %645 = vmatpush1.msra.mxu0 0.0
        %646 = vmatprep.subr.mxu0 %v594
        %647 = vmatpush1.msra.mxu0 %v593
        %648 = vmatprep.subr.mxu0 0.0
        %649 = vmatpush2.msra.mxu0 0.0
        %650 = vmatprep.subr.mxu0 0.0
        %651 = vmatpush2.msra.mxu0 0.0
        %652 = vmatprep.subr.mxu0 0.0
        %653 = vmatpush2.msra.mxu0 0.0
        %654 = vmatprep.subr.mxu0 0.0
        %655 = vmatpush2.msra.mxu0 0.0
        %656 = vmatprep.subr.mxu0 0.0
        %657 = vmatpush2.msra.mxu0 0.0
        %658 = vmatprep.subr.mxu0 0.0
        %659 = vmatpush2.msra.mxu0 0.0
        %660 = vmatprep.subr.mxu0 0.0
        %661 = vmatpush2.msra.mxu0 0.0
        %662 = vmatprep.subr.mxu0 0.0
        %663 = vmatpush2.msra.mxu0 0.0
        %664 = vmatprep.subr.mxu0 0.0
        %665 = vmatpush2.msra.mxu0 0.0
        %666 = vmatprep.subr.mxu0 0.0
        %667 = vmatpush2.msra.mxu0 0.0
        %668 = vmatprep.subr.mxu0 0.0
        %669 = vmatpush2.msra.mxu0 0.0
        %670 = vmatprep.subr.mxu0 0.0
        %671 = vmatpush2.msra.mxu0 0.0
        %672 = vmatprep.subr.mxu0 0.0
        %673 = vmatpush2.msra.mxu0 0.0
        %674 = vmatprep.subr.mxu0 0.0
        %675 = vmatpush2.msra.mxu0 0.0
        %676 = vmatprep.subr.mxu0 0.0
        %677 = vmatpush2.msra.mxu0 0.0
        %678 = vmatprep.subr.mxu0 0.0
        %679 = vmatpush2.msra.mxu0 0.0
        %680 = vmatprep.mubr.f32.mxu0 0.0
        %681 = vmatmul.mubr.f32.gmra.mxu0 %v611
        %v682 = vpop.f32.mrf.mxu0
        %v683 = vadd.f32 %v602, %v682
        %v684 = vpop.f32.mrf.mxu0
        %v685 = vadd.f32 %v602, %v684
        %686 = vmatprep.mubr.f32.mxu0 0.0
        %687 = vmatmul.mubr.f32.gmra.mxu0 %v614
        %v688 = vpop.f32.mrf.mxu0
        %v689 = vadd.f32 %v607, %v688
        %v690 = vpop.f32.mrf.mxu0
        %v691 = vadd.f32 %v607, %v690
        %692 = vdwg.mxu0
        %v693 = vmax.f32 %v683, 0.0
        %v694 = vmax.f32 %v685, 0.0
        %v695 = vmax.f32 %v689, 0.0
        %v696 = vmax.f32 %v691, 0.0
        %v697 = vadd.f32 %v593, %v594
        %698 = vadd.xlane.f32.xlu0 %v697
        %v699 = vpop.xlane.xlu0 %698
        %v700 = vmul.f32 %v699, 0.00390625
        %v701 = vadd.f32 %v693, %v694
        %702 = vadd.xlane.f32.xlu0 %v701
        %v703 = vpop.xlane.xlu0 %702
        %v704 = vadd.f32 %v695, %v696
        %705 = vadd.xlane.f32.xlu0 %v704
        %v706 = vpop.xlane.xlu0 %705
        %v707 = vmul.f32 %v703, 0.00390625
        %v708 = vmul.f32 %v706, 0.00390625
        %v709 = vld [vmem:[%s5] sm:$0xff]
        %v710 = vld [vmem:[%s5 + $0x8] sm:$0xff]
        %v711 = vld [vmem:[%s6] sm:$0x1]
        %v714 = vlaneseq
        %v715 = vand.u32 %v714, 127
        %v716 = vlaneseq
        %v717 = vshrl.u32 %v716, 7
        %v718 = vsub.s32 %v715, %v717
        %v719 = vrot.slane %v707, %v718
        %v720 = vadd.s32 %v715, 4294967288
        %v721 = vlaneseq
        %v722 = vshrl.u32 %v721, 7
        %v723 = vsub.s32 %v720, %v722
        %v724 = vrot.slane %v708, %v723
        %vm725 = vcmask 130112
        %v726 = vsel %vm725, %v724, %v719
        %vm727 = vcmask 130048
        %v728 = vsel %vm727, %v726, 0
        %730 = vmatprep.subr.mxu0 0.0
        %731 = vmatpush1.msra.mxu0 0.0
        %732 = vmatprep.subr.mxu0 0.0
        %733 = vmatpush1.msra.mxu0 0.0
        %734 = vmatprep.subr.mxu0 0.0
        %735 = vmatpush1.msra.mxu0 0.0
        %736 = vmatprep.subr.mxu0 0.0
        %737 = vmatpush1.msra.mxu0 0.0
        %738 = vmatprep.subr.mxu0 0.0
        %739 = vmatpush1.msra.mxu0 0.0
        %740 = vmatprep.subr.mxu0 0.0
        %741 = vmatpush1.msra.mxu0 0.0
        %742 = vmatprep.subr.mxu0 0.0
        %743 = vmatpush1.msra.mxu0 0.0
        %744 = vmatprep.subr.mxu0 0.0
        %745 = vmatpush1.msra.mxu0 0.0
        %746 = vmatprep.subr.mxu0 0.0
        %747 = vmatpush1.msra.mxu0 0.0
        %748 = vmatprep.subr.mxu0 0.0
        %749 = vmatpush1.msra.mxu0 0.0
        %750 = vmatprep.subr.mxu0 0.0
        %751 = vmatpush1.msra.mxu0 0.0
        %752 = vmatprep.subr.mxu0 0.0
        %753 = vmatpush1.msra.mxu0 0.0
        %754 = vmatprep.subr.mxu0 0.0
        %755 = vmatpush1.msra.mxu0 0.0
        %756 = vmatprep.subr.mxu0 0.0
        %757 = vmatpush1.msra.mxu0 0.0
        %758 = vmatprep.subr.mxu0 0.0
        %759 = vmatpush1.msra.mxu0 %v710
        %760 = vmatprep.subr.mxu0 0.0
        %761 = vmatpush1.msra.mxu0 %v709
        %762 = vmatprep.subr.mxu0 0.0
        %763 = vmatpush2.msra.mxu0 0.0
        %764 = vmatprep.subr.mxu0 0.0
        %765 = vmatpush2.msra.mxu0 0.0
        %766 = vmatprep.subr.mxu0 0.0
        %767 = vmatpush2.msra.mxu0 0.0
        %768 = vmatprep.subr.mxu0 0.0
        %769 = vmatpush2.msra.mxu0 0.0
        %770 = vmatprep.subr.mxu0 0.0
        %771 = vmatpush2.msra.mxu0 0.0
        %772 = vmatprep.subr.mxu0 0.0
        %773 = vmatpush2.msra.mxu0 0.0
        %774 = vmatprep.subr.mxu0 0.0
        %775 = vmatpush2.msra.mxu0 0.0
        %776 = vmatprep.subr.mxu0 0.0
        %777 = vmatpush2.msra.mxu0 0.0
        %778 = vmatprep.subr.mxu0 0.0
        %779 = vmatpush2.msra.mxu0 0.0
        %780 = vmatprep.subr.mxu0 0.0
        %781 = vmatpush2.msra.mxu0 0.0
        %782 = vmatprep.subr.mxu0 0.0
        %783 = vmatpush2.msra.mxu0 0.0
        %784 = vmatprep.subr.mxu0 0.0
        %785 = vmatpush2.msra.mxu0 0.0
        %786 = vmatprep.subr.mxu0 0.0
        %787 = vmatpush2.msra.mxu0 0.0
        %788 = vmatprep.subr.mxu0 0.0
        %789 = vmatpush2.msra.mxu0 0.0
        %790 = vmatprep.subr.mxu0 0.0
        %791 = vmatpush2.msra.mxu0 0.0
        %792 = vmatprep.subr.mxu0 0.0
        %793 = vmatpush2.msra.mxu0 0.0
        %794 = vmatprep.mubr.f32.mxu0 0.0
        %795 = vmatmul.mubr.f32.gmra.mxu0 %v728
        %v796 = vpop.f32.mrf.mxu0
        %v797 = vadd.f32 %v711, %v796
        %v798 = vpop.f32.mrf.mxu0
        %799 = vdwg.mxu0
        %vm800 = vcmask 73728
        %801 = vst.msk [vmem:[%s489] sm:$0x1] %vm800, %v797
        %v802 = vld [vmem:[%s7] sm:$0xff]
        %v803 = vld [vmem:[%s8] sm:$0x1]
        %v805 = vlaneseq
        %v806 = vshrl.u32 %v805, 7
        %v807 = vsub.s32 %v715, %v806
        %v808 = vrot.slane %v700, %v807
        %v809 = vsel %vm609, %v808, 0
        %811 = vmatprep.subr.mxu0 0.0
        %812 = vmatpush1.msra.mxu0 0.0
        %813 = vmatprep.subr.mxu0 0.0
        %814 = vmatpush1.msra.mxu0 0.0
        %815 = vmatprep.subr.mxu0 0.0
        %816 = vmatpush1.msra.mxu0 0.0
        %817 = vmatprep.subr.mxu0 0.0
        %818 = vmatpush1.msra.mxu0 0.0
        %819 = vmatprep.subr.mxu0 0.0
        %820 = vmatpush1.msra.mxu0 0.0
        %821 = vmatprep.subr.mxu0 0.0
        %822 = vmatpush1.msra.mxu0 0.0
        %823 = vmatprep.subr.mxu0 0.0
        %824 = vmatpush1.msra.mxu0 0.0
        %825 = vmatprep.subr.mxu0 0.0
        %826 = vmatpush1.msra.mxu0 0.0
        %827 = vmatprep.subr.mxu0 0.0
        %828 = vmatpush1.msra.mxu0 0.0
        %829 = vmatprep.subr.mxu0 0.0
        %830 = vmatpush1.msra.mxu0 0.0
        %831 = vmatprep.subr.mxu0 0.0
        %832 = vmatpush1.msra.mxu0 0.0
        %833 = vmatprep.subr.mxu0 0.0
        %834 = vmatpush1.msra.mxu0 0.0
        %835 = vmatprep.subr.mxu0 0.0
        %836 = vmatpush1.msra.mxu0 0.0
        %837 = vmatprep.subr.mxu0 0.0
        %838 = vmatpush1.msra.mxu0 0.0
        %839 = vmatprep.subr.mxu0 0.0
        %840 = vmatpush1.msra.mxu0 0.0
        %841 = vmatprep.subr.mxu0 0.0
        %842 = vmatpush1.msra.mxu0 %v802
        %843 = vmatprep.subr.mxu0 0.0
        %844 = vmatpush2.msra.mxu0 0.0
        %845 = vmatprep.subr.mxu0 0.0
        %846 = vmatpush2.msra.mxu0 0.0
        %847 = vmatprep.subr.mxu0 0.0
        %848 = vmatpush2.msra.mxu0 0.0
        %849 = vmatprep.subr.mxu0 0.0
        %850 = vmatpush2.msra.mxu0 0.0
        %851 = vmatprep.subr.mxu0 0.0
        %852 = vmatpush2.msra.mxu0 0.0
        %853 = vmatprep.subr.mxu0 0.0
        %854 = vmatpush2.msra.mxu0 0.0
        %855 = vmatprep.subr.mxu0 0.0
        %856 = vmatpush2.msra.mxu0 0.0
        %857 = vmatprep.subr.mxu0 0.0
        %858 = vmatpush2.msra.mxu0 0.0
        %859 = vmatprep.subr.mxu0 0.0
        %860 = vmatpush2.msra.mxu0 0.0
        %861 = vmatprep.subr.mxu0 0.0
        %862 = vmatpush2.msra.mxu0 0.0
        %863 = vmatprep.subr.mxu0 0.0
        %864 = vmatpush2.msra.mxu0 0.0
        %865 = vmatprep.subr.mxu0 0.0
        %866 = vmatpush2.msra.mxu0 0.0
        %867 = vmatprep.subr.mxu0 0.0
        %868 = vmatpush2.msra.mxu0 0.0
        %869 = vmatprep.subr.mxu0 0.0
        %870 = vmatpush2.msra.mxu0 0.0
        %871 = vmatprep.subr.mxu0 0.0
        %872 = vmatpush2.msra.mxu0 0.0
        %873 = vmatprep.subr.mxu0 0.0
        %874 = vmatpush2.msra.mxu0 0.0
        %875 = vmatprep.mubr.f32.mxu0 0.0
        %876 = vmatmul.mubr.f32.gmra.mxu0 %v809
        %v877 = vpop.f32.mrf.mxu0
        %v878 = vadd.f32 %v803, %v877
        %v879 = vpop.f32.mrf.mxu0
        %880 = vdwg.mxu0
        %v881 = vmax.f32 %v878, 0.0
        %v882 = vld [vmem:[%s9] sm:$0xff]
        %v883 = vld [vmem:[%s9 + $0x8] sm:$0xff]
        %v884 = vld [vmem:[%s10] sm:$0x1]
        %885 = vmatprep.subr.mxu0 0.0
        %886 = vmatpush1.msra.mxu0 0.0
        %887 = vmatprep.subr.mxu0 0.0
        %888 = vmatpush1.msra.mxu0 0.0
        %889 = vmatprep.subr.mxu0 0.0
        %890 = vmatpush1.msra.mxu0 0.0
        %891 = vmatprep.subr.mxu0 0.0
        %892 = vmatpush1.msra.mxu0 0.0
        %893 = vmatprep.subr.mxu0 0.0
        %894 = vmatpush1.msra.mxu0 0.0
        %895 = vmatprep.subr.mxu0 0.0
        %896 = vmatpush1.msra.mxu0 0.0
        %897 = vmatprep.subr.mxu0 0.0
        %898 = vmatpush1.msra.mxu0 0.0
        %899 = vmatprep.subr.mxu0 0.0
        %900 = vmatpush1.msra.mxu0 0.0
        %901 = vmatprep.subr.mxu0 0.0
        %902 = vmatpush1.msra.mxu0 0.0
        %903 = vmatprep.subr.mxu0 0.0
        %904 = vmatpush1.msra.mxu0 0.0
        %905 = vmatprep.subr.mxu0 0.0
        %906 = vmatpush1.msra.mxu0 0.0
        %907 = vmatprep.subr.mxu0 0.0
        %908 = vmatpush1.msra.mxu0 0.0
        %909 = vmatprep.subr.mxu0 0.0
        %910 = vmatpush1.msra.mxu0 0.0
        %911 = vmatprep.subr.mxu0 0.0
        %912 = vmatpush1.msra.mxu0 0.0
        %913 = vmatprep.subr.mxu0 0.0
        %914 = vmatpush1.msra.mxu0 %v883
        %915 = vmatprep.subr.mxu0 0.0
        %916 = vmatpush1.msra.mxu0 %v882
        %917 = vmatprep.subr.mxu0 0.0
        %918 = vmatpush2.msra.mxu0 0.0
        %919 = vmatprep.subr.mxu0 0.0
        %920 = vmatpush2.msra.mxu0 0.0
        %921 = vmatprep.subr.mxu0 0.0
        %922 = vmatpush2.msra.mxu0 0.0
        %923 = vmatprep.subr.mxu0 0.0
        %924 = vmatpush2.msra.mxu0 0.0
        %925 = vmatprep.subr.mxu0 0.0
        %926 = vmatpush2.msra.mxu0 0.0
        %927 = vmatprep.subr.mxu0 0.0
        %928 = vmatpush2.msra.mxu0 0.0
        %929 = vmatprep.subr.mxu0 0.0
        %930 = vmatpush2.msra.mxu0 0.0
        %931 = vmatprep.subr.mxu0 0.0
        %932 = vmatpush2.msra.mxu0 0.0
        %933 = vmatprep.subr.mxu0 0.0
        %934 = vmatpush2.msra.mxu0 0.0
        %935 = vmatprep.subr.mxu0 0.0
        %936 = vmatpush2.msra.mxu0 0.0
        %937 = vmatprep.subr.mxu0 0.0
        %938 = vmatpush2.msra.mxu0 0.0
        %939 = vmatprep.subr.mxu0 0.0
        %940 = vmatpush2.msra.mxu0 0.0
        %941 = vmatprep.subr.mxu0 0.0
        %942 = vmatpush2.msra.mxu0 0.0
        %943 = vmatprep.subr.mxu0 0.0
        %944 = vmatpush2.msra.mxu0 0.0
        %945 = vmatprep.subr.mxu0 0.0
        %946 = vmatpush2.msra.mxu0 0.0
        %947 = vmatprep.subr.mxu0 0.0
        %948 = vmatpush2.msra.mxu0 0.0
        %949 = vmatprep.mubr.f32.mxu0 0.0
        %950 = vmatmul.mubr.f32.gmra.mxu0 %v728
        %v951 = vpop.f32.mrf.mxu0
        %v952 = vadd.f32 %v884, %v951
        %v953 = vpop.f32.mrf.mxu0
        %954 = vdwg.mxu0
        %v955 = vmax.f32 %v952, 0.0
        %v956 = vld [vmem:[%s11] sm:$0xff]
        %v957 = vld [vmem:[%s11 + $0x8] sm:$0xff]
        %v958 = vld [vmem:[%s11 + $0x10] sm:$0xff]
        %v959 = vld [vmem:[%s11 + $0x18] sm:$0xff]
        %v960 = vld [vmem:[%s11 + $0x20] sm:$0xff]
        %v961 = vld [vmem:[%s11 + $0x28] sm:$0xff]
        %v962 = vld [vmem:[%s11 + $0x30] sm:$0xff]
        %v963 = vld [vmem:[%s11 + $0x38] sm:$0xff]
        %v964 = vld [vmem:[%s11 + $0x40] sm:$0xff]
        %v965 = vld [vmem:[%s11 + $0x48] sm:$0xff]
        %v966 = vld [vmem:[%s11 + $0x50] sm:$0xff]
        %v967 = vld [vmem:[%s11 + $0x58] sm:$0xff]
        %v968 = vld [vmem:[%s11 + $0x60] sm:$0xff]
        %v969 = vld [vmem:[%s11 + $0x68] sm:$0xff]
        %v970 = vld [vmem:[%s11 + $0x70] sm:$0xff]
        %v971 = vld [vmem:[%s11 + $0x78] sm:$0xff]
        %v972 = vld [vmem:[%s12] sm:$0xff]
        %v973 = vld [vmem:[%s12 + $0x8] sm:$0xff]
        %v974 = vld [vmem:[%s12 + $0x10] sm:$0xff]
        %v975 = vld [vmem:[%s12 + $0x18] sm:$0xff]
        %v976 = vld [vmem:[%s12 + $0x20] sm:$0xff]
        %v977 = vld [vmem:[%s12 + $0x28] sm:$0xff]
        %v978 = vld [vmem:[%s12 + $0x30] sm:$0xff]
        %v979 = vld [vmem:[%s12 + $0x38] sm:$0xff]
        %v980 = vld [vmem:[%s12 + $0x40] sm:$0xff]
        %v981 = vld [vmem:[%s12 + $0x48] sm:$0xff]
        %v982 = vld [vmem:[%s12 + $0x50] sm:$0xff]
        %v983 = vld [vmem:[%s12 + $0x58] sm:$0xff]
        %v984 = vld [vmem:[%s12 + $0x60] sm:$0xff]
        %v985 = vld [vmem:[%s12 + $0x68] sm:$0xff]
        %v986 = vld [vmem:[%s12 + $0x70] sm:$0xff]
        %v987 = vld [vmem:[%s12 + $0x78] sm:$0xff]
        %988 = vmatprep.subr.mxu0 0.0
        %989 = vmatpush1.msra.mxu0 %v987
        %990 = vmatprep.subr.mxu0 0.0
        %991 = vmatpush1.msra.mxu0 %v986
        %992 = vmatprep.subr.mxu0 0.0
        %993 = vmatpush1.msra.mxu0 %v985
        %994 = vmatprep.subr.mxu0 0.0
        %995 = vmatpush1.msra.mxu0 %v984
        %996 = vmatprep.subr.mxu0 0.0
        %997 = vmatpush1.msra.mxu0 %v983
        %998 = vmatprep.subr.mxu0 0.0
        %999 = vmatpush1.msra.mxu0 %v982
        %1000 = vmatprep.subr.mxu0 0.0
        %1001 = vmatpush1.msra.mxu0 %v981
        %1002 = vmatprep.subr.mxu0 0.0
        %1003 = vmatpush1.msra.mxu0 %v980
        %1004 = vmatprep.subr.mxu0 0.0
        %1005 = vmatpush1.msra.mxu0 %v979
        %1006 = vmatprep.subr.mxu0 0.0
        %1007 = vmatpush1.msra.mxu0 %v978
        %1008 = vmatprep.subr.mxu0 0.0
        %1009 = vmatpush1.msra.mxu0 %v977
        %1010 = vmatprep.subr.mxu0 0.0
        %1011 = vmatpush1.msra.mxu0 %v976
        %1012 = vmatprep.subr.mxu0 0.0
        %1013 = vmatpush1.msra.mxu0 %v975
        %1014 = vmatprep.subr.mxu0 0.0
        %1015 = vmatpush1.msra.mxu0 %v974
        %1016 = vmatprep.subr.mxu0 0.0
        %1017 = vmatpush1.msra.mxu0 %v973
        %1018 = vmatprep.subr.mxu0 0.0
        %1019 = vmatpush1.msra.mxu0 %v972
        %1020 = vmatprep.subr.mxu0 0.0
        %1021 = vmatpush2.msra.mxu0 0.0
        %1022 = vmatprep.subr.mxu0 0.0
        %1023 = vmatpush2.msra.mxu0 0.0
        %1024 = vmatprep.subr.mxu0 0.0
        %1025 = vmatpush2.msra.mxu0 0.0
        %1026 = vmatprep.subr.mxu0 0.0
        %1027 = vmatpush2.msra.mxu0 0.0
        %1028 = vmatprep.subr.mxu0 0.0
        %1029 = vmatpush2.msra.mxu0 0.0
        %1030 = vmatprep.subr.mxu0 0.0
        %1031 = vmatpush2.msra.mxu0 0.0
        %1032 = vmatprep.subr.mxu0 0.0
        %1033 = vmatpush2.msra.mxu0 0.0
        %1034 = vmatprep.subr.mxu0 0.0
        %1035 = vmatpush2.msra.mxu0 0.0
        %1036 = vmatprep.subr.mxu0 0.0
        %1037 = vmatpush2.msra.mxu0 0.0
        %1038 = vmatprep.subr.mxu0 0.0
        %1039 = vmatpush2.msra.mxu0 0.0
        %1040 = vmatprep.subr.mxu0 0.0
        %1041 = vmatpush2.msra.mxu0 0.0
        %1042 = vmatprep.subr.mxu0 0.0
        %1043 = vmatpush2.msra.mxu0 0.0
        %1044 = vmatprep.subr.mxu0 0.0
        %1045 = vmatpush2.msra.mxu0 0.0
        %1046 = vmatprep.subr.mxu0 0.0
        %1047 = vmatpush2.msra.mxu0 0.0
        %1048 = vmatprep.subr.mxu0 0.0
        %1049 = vmatpush2.msra.mxu0 0.0
        %1050 = vmatprep.subr.mxu0 0.0
        %1051 = vmatpush2.msra.mxu0 0.0
        %1052 = vmatprep.mubr.f32.mxu0 0.0
        %1053 = vmatmul.mubr.f32.gmra.mxu0 %v955
        %v1054 = vpop.f32.mrf.mxu0
        %v1055 = vadd.f32 0.0, %v1054
        %v1056 = vpop.f32.mrf.mxu0
        %1057 = vdwg.mxu0
        %1058 = vmatprep.subr.mxu0 0.0
        %1059 = vmatpush1.msra.mxu0 %v971
        %1060 = vmatprep.subr.mxu0 0.0
        %1061 = vmatpush1.msra.mxu0 %v970
        %1062 = vmatprep.subr.mxu0 0.0
        %1063 = vmatpush1.msra.mxu0 %v969
        %1064 = vmatprep.subr.mxu0 0.0
        %1065 = vmatpush1.msra.mxu0 %v968
        %1066 = vmatprep.subr.mxu0 0.0
        %1067 = vmatpush1.msra.mxu0 %v967
        %1068 = vmatprep.subr.mxu0 0.0
        %1069 = vmatpush1.msra.mxu0 %v966
        %1070 = vmatprep.subr.mxu0 0.0
        %1071 = vmatpush1.msra.mxu0 %v965
        %1072 = vmatprep.subr.mxu0 0.0
        %1073 = vmatpush1.msra.mxu0 %v964
        %1074 = vmatprep.subr.mxu0 0.0
        %1075 = vmatpush1.msra.mxu0 %v963
        %1076 = vmatprep.subr.mxu0 0.0
        %1077 = vmatpush1.msra.mxu0 %v962
        %1078 = vmatprep.subr.mxu0 0.0
        %1079 = vmatpush1.msra.mxu0 %v961
        %1080 = vmatprep.subr.mxu0 0.0
        %1081 = vmatpush1.msra.mxu0 %v960
        %1082 = vmatprep.subr.mxu0 0.0
        %1083 = vmatpush1.msra.mxu0 %v959
        %1084 = vmatprep.subr.mxu0 0.0
        %1085 = vmatpush1.msra.mxu0 %v958
        %1086 = vmatprep.subr.mxu0 0.0
        %1087 = vmatpush1.msra.mxu0 %v957
        %1088 = vmatprep.subr.mxu0 0.0
        %1089 = vmatpush1.msra.mxu0 %v956
        %1090 = vmatprep.subr.mxu0 0.0
        %1091 = vmatpush2.msra.mxu0 0.0
        %1092 = vmatprep.subr.mxu0 0.0
        %1093 = vmatpush2.msra.mxu0 0.0
        %1094 = vmatprep.subr.mxu0 0.0
        %1095 = vmatpush2.msra.mxu0 0.0
        %1096 = vmatprep.subr.mxu0 0.0
        %1097 = vmatpush2.msra.mxu0 0.0
        %1098 = vmatprep.subr.mxu0 0.0
        %1099 = vmatpush2.msra.mxu0 0.0
        %1100 = vmatprep.subr.mxu0 0.0
        %1101 = vmatpush2.msra.mxu0 0.0
        %1102 = vmatprep.subr.mxu0 0.0
        %1103 = vmatpush2.msra.mxu0 0.0
        %1104 = vmatprep.subr.mxu0 0.0
        %1105 = vmatpush2.msra.mxu0 0.0
        %1106 = vmatprep.subr.mxu0 0.0
        %1107 = vmatpush2.msra.mxu0 0.0
        %1108 = vmatprep.subr.mxu0 0.0
        %1109 = vmatpush2.msra.mxu0 0.0
        %1110 = vmatprep.subr.mxu0 0.0
        %1111 = vmatpush2.msra.mxu0 0.0
        %1112 = vmatprep.subr.mxu0 0.0
        %1113 = vmatpush2.msra.mxu0 0.0
        %1114 = vmatprep.subr.mxu0 0.0
        %1115 = vmatpush2.msra.mxu0 0.0
        %1116 = vmatprep.subr.mxu0 0.0
        %1117 = vmatpush2.msra.mxu0 0.0
        %1118 = vmatprep.subr.mxu0 0.0
        %1119 = vmatpush2.msra.mxu0 0.0
        %1120 = vmatprep.subr.mxu0 0.0
        %1121 = vmatpush2.msra.mxu0 0.0
        %1122 = vmatprep.mubr.f32.mxu0 0.0
        %1123 = vmatmul.mubr.f32.gmra.mxu0 %v881
        %v1124 = vpop.f32.mrf.mxu0
        %v1125 = vadd.f32 %v1055, %v1124
        %v1126 = vpop.f32.mrf.mxu0
        %1127 = vdwg.mxu0
        %v1128 = vld [vmem:[#allocation2] sm:$0x1]
        %v1129 = vadd.f32 %v1125, %v1128
        %vm1130 = vcmask 0
        %1131 = vst.msk [vmem:[%s502] sm:$0x1] %vm1130, %v1129
        %s1132 = sand.u32 %s339, 1
        %s1133 = scalar_lea.sflag [#allocation4], %s1132
        %s1134 = sand.u32 %s339, 1
        %s1135 = scalar_lea.vmem [#allocation3], %s1134
        %p1136 = scmp.lt.s32.totalorder %s32, 1
        %s1137 = scalar_select %p1136, %s32, 1
        %s1138 = scalar_lea.vmem %s15, %s1137
        // Predicated region
        $region77: #{tpu_custom_call.1} parent=75 // pred_check
          %p1139 = pneg %p349
        $region78: #{tpu_custom_call.1} parent=75 // pred_check_branch
          %1141 = sbr.rel (%p1139) target = $region80
        $region79: #{tpu_custom_call.1} parent=75 // pred_region
          %s1143 = ssub.s32 16, 16
          %1144 = vsyncadd %s1133, %s1143
          %s1145 = smul.addr %s32, 16
          %s1146 = scalar_lea.hbm %s14, %s1145
          %s1148 = sshll.u32 %s1135, 4
          %s1149 = int_to_ptr.vmem [resolvable:$true] %s1148
          %1151 = dma.vmem_to_hbm [thread:$0]  %s1149, 16, %s1146, %s1133
        $region80: #{tpu_custom_call.1} parent=75 // pred_fallthru
          _
        // Predicated region
        $region81: #{tpu_custom_call.1} parent=75 // pred_check
          %p1152 = pneg %p375
        $region82: #{tpu_custom_call.1} parent=75 // pred_check_branch
          %1154 = sbr.rel (%p1152) target = $region84
        $region83: #{tpu_custom_call.1} parent=75 // pred_region
          _
        $region84: #{tpu_custom_call.1} parent=75 // pred_fallthru
          _
      $region76: #{tpu_custom_call.1} parent=5 // pred_fallthru
        _
      %p1155 = scmp.le.s32.totalorder 2, %s27
      // Predicated region
      $region85: #{tpu_custom_call.1} parent=5 // pred_check
        %p1156 = pneg %p1155
      $region86: #{tpu_custom_call.1} parent=5 // pred_check_branch
        %1158 = sbr.rel (%p1156) target = $region88
      $region87: #{tpu_custom_call.1} parent=5 // pred_region
        %s1159 = ssub.s32 %s27, 2
        // Predicated region
        $region89: #{tpu_custom_call.1} parent=87 // pred_check
          %p1160 = pneg %p355
        $region90: #{tpu_custom_call.1} parent=87 // pred_check_branch
          %1162 = sbr.rel (%p1160) target = $region92
        $region91: #{tpu_custom_call.1} parent=87 // pred_region
          %s1163 = sand.u32 %s340, 1
          %s1164 = scalar_lea.sflag [#allocation4], %s1163
          %s1165 = sand.u32 %s340, 1
          %s1166 = scalar_lea.vmem [#allocation3], %s1165
          %1167 = dma.done %s1164, 16
        $region92: #{tpu_custom_call.1} parent=87 // pred_fallthru
          _
        // Predicated region
        $region93: #{tpu_custom_call.1} parent=87 // pred_check
          %p1168 = pneg %p381
        $region94: #{tpu_custom_call.1} parent=87 // pred_check_branch
          %1170 = sbr.rel (%p1168) target = $region96
        $region95: #{tpu_custom_call.1} parent=87 // pred_region
          %p1171 = scmp.lt.s32.totalorder %s33, 1
          %s1172 = scalar_select %p1171, %s33, 1
          %s1173 = scalar_lea.vmem %s15, %s1172
        $region96: #{tpu_custom_call.1} parent=87 // pred_fallthru
          _
      $region88: #{tpu_custom_call.1} parent=5 // pred_fallthru
        _
    $region6: #{tpu_custom_call.1} parent=1 // loop_footer
      %s31 = sadd.s32 1, %s27
    $region7: #{tpu_custom_call.1} parent=1 // loop_footer_branch
      %26 = sbr.rel target = $region3
    $region8: #{tpu_custom_call.1} parent=1 // loop_exit
      _
    %1174 = vsyncpa [#allocation4], 1
    %s1175 = scalar_lea.sflag [#allocation4], 1
    %1176 = vsyncpa %s1175, 1

</llo_original>
